<compile_context>
chip_gen: v7x
topology: tpu7x:2x2x1
jax: 0.10.0
libtpu: 0.0.40
codegen_flags: <defaults>
</compile_context>

<pallas_src>
import functools

import jax
import jax.numpy as jnp
from jax.experimental import pallas as pl
from jax.experimental.pallas import tpu as pltpu


def _layernorm_rows_kernel(x_ref, g_ref, b_ref, o_ref, *, eps):
    """General path: one normalized group (length D) per row."""
    x = x_ref[...].astype(jnp.float32)                 # (tile_rows, D)
    d = x.shape[-1]
    # Two-pass statistics: robust against cancellation, no extra HBM traffic.
    mean = jnp.sum(x, axis=-1, keepdims=True) * (1.0 / d)
    c = x - mean
    var = jnp.sum(c * c, axis=-1, keepdims=True) * (1.0 / max(d - 1, 1))
    inv = 1.0 / (jnp.sqrt(var) + eps)                  # torch: /(std + eps)
    gamma = g_ref[...].astype(jnp.float32)             # (1, D)
    beta = b_ref[...].astype(jnp.float32)              # (1, D)
    o_ref[...] = (c * inv * gamma + beta).astype(o_ref.dtype)
    # TODO(synk): if a bundle dump shows the XLU binding before HBM on v7x,
    # move these two row-sums onto the MXU (x @ ones(D,1)) as well.


def _layernorm_packed_kernel(x_ref, g_ref, b_ref, seg_ref, segt_ref, o_ref,
                             *, eps, d):
    """Lane-dense path for D < 128: `pack` rows folded into each 128-lane row.

    Segmented reductions and broadcast-backs are matmuls against tiny 0/1
    selector matrices -> they run on the idle MXU, keep the VPU/XLU free, and
    output stores stay full-width unmasked vst.
    """
    x = x_ref[...].astype(jnp.float32)                 # (tile_rows, pack*D)
    seg = seg_ref[...]                                  # (pack*D, pack) 0/1
    segt = segt_ref[...]                                # (pack, pack*D) 0/1
    hi = jax.lax.Precision.HIGHEST                      # exact with 0/1 weights
    s1 = jnp.dot(x, seg, preferred_element_type=jnp.float32, precision=hi)
    mean = s1 * (1.0 / d)                               # (tile_rows, pack)
    mean_b = jnp.dot(mean, segt, preferred_element_type=jnp.float32,
                     precision=hi)                      # broadcast back
    c = x - mean_b
    s2 = jnp.dot(c * c, seg, preferred_element_type=jnp.float32, precision=hi)
    inv = 1.0 / (jnp.sqrt(s2 * (1.0 / max(d - 1, 1))) + eps)
    inv_b = jnp.dot(inv, segt, preferred_element_type=jnp.float32,
                    precision=hi)
    gamma = g_ref[...].astype(jnp.float32)              # (1, pack*D) pre-tiled
    beta = b_ref[...].astype(jnp.float32)
    o_ref[...] = (c * inv_b * gamma + beta).astype(o_ref.dtype)


def _tpu_vmem_capacity_bytes():
    try:
        return int(pltpu.get_tpu_info().vmem_capacity_bytes)
    except Exception:
        return 64 * 1024 * 1024          # assume the smallest (v7x) if unknown


def _pick_tile_rows(rows, width, itemsize, target_block_bytes):
    """Row-tile size: ~target_block_bytes blocks, sublane-aligned, and at
    least 4 grid steps (2 per v7x TensorCore) when there are enough rows."""
    sublane = max(8, 32 // max(itemsize, 1))        # 8 f32, 16 bf16, 32 int8
    if rows <= sublane:
        return rows                                 # full-extent block is legal
    t = max(sublane, target_block_bytes // max(width * itemsize, 1))
    t = (t // sublane) * sublane
    if t * 4 > rows:
        t4 = ((rows // 4) // sublane) * sublane
        if t4 >= sublane:
            t = t4
    return max(sublane, min(t, (rows // sublane) * sublane))


def layer_norm(x, gamma, beta, eps=1e-6, tile_rows=None,
               target_block_bytes=None):
    """x: (..., D); gamma, beta: (D,). LayerNorm over the last axis
    (PyTorch module semantics: unbiased std, divide by (std + eps))."""
    orig_shape = x.shape
    d = orig_shape[-1]
    rows = 1
    for s in orig_shape[:-1]:
        rows *= s
    itemsize = jnp.dtype(x.dtype).itemsize

    vmem = _tpu_vmem_capacity_bytes()
    big_vmem = vmem >= (100 << 20)                  # v5e / v6e (128 MiB)
    if target_block_bytes is None:
        base = (16 << 20) if big_vmem else (8 << 20)
        # Budget the in-kernel f32 upcast for narrow dtypes.
        target_block_bytes = max(2 << 20, base * itemsize // 4)
    vmem_limit = (96 << 20) if big_vmem else (48 << 20)

    compiler_params = pltpu.CompilerParams(
        dimension_semantics=("parallel",),
        vmem_limit_bytes=vmem_limit,
    )

    # Lane-dense repack for small D: fold `pack` rows into one 128-lane row.
    pack = 128 // d if (d < 128 and 128 % d == 0) else 1
    use_packed = pack > 1 and rows >= pack and rows % pack == 0
    # TODO(synk): D<128 with 128 % D != 0 (or rows % pack != 0) still takes the
    # masked-store path below; a gcd-based pack factor would cover it too.

    if use_packed:
        width = pack * d
        rows_p = rows // pack
        x2 = x.reshape(rows_p, width)               # metadata-only reshape
        gamma_t = jnp.tile(gamma.reshape(1, d), (1, pack))
        beta_t = jnp.tile(beta.reshape(1, d), (1, pack))
        seg = (jnp.arange(width, dtype=jnp.int32)[:, None] // d
               == jnp.arange(pack, dtype=jnp.int32)[None, :]).astype(jnp.float32)
        segt = seg.T
        if tile_rows is None:
            tile_rows = _pick_tile_rows(rows_p, width, itemsize,
                                        target_block_bytes)
        out = pl.pallas_call(
            functools.partial(_layernorm_packed_kernel, eps=eps, d=d),
            out_shape=jax.ShapeDtypeStruct((rows_p, width), x.dtype),
            grid_spec=pltpu.PrefetchScalarGridSpec(
                num_scalar_prefetch=0,
                grid=(pl.cdiv(rows_p, tile_rows),),   # no wrapper pad/slice
                in_specs=[
                    pl.BlockSpec((tile_rows, width), lambda i: (i, 0)),
                    pl.BlockSpec((1, width), lambda i: (0, 0)),
                    pl.BlockSpec((1, width), lambda i: (0, 0)),
                    pl.BlockSpec((width, pack), lambda i: (0, 0)),
                    pl.BlockSpec((pack, width), lambda i: (0, 0)),
                ],
                out_specs=pl.BlockSpec((tile_rows, width), lambda i: (i, 0)),
            ),
            compiler_params=compiler_params,
        )(x2, gamma_t, beta_t, seg, segt)
        return out.reshape(orig_shape)

    x2 = x.reshape(rows, d)
    if tile_rows is None:
        tile_rows = _pick_tile_rows(rows, d, itemsize, target_block_bytes)
    out = pl.pallas_call(
        functools.partial(_layernorm_rows_kernel, eps=eps),
        out_shape=jax.ShapeDtypeStruct((rows, d), x.dtype),
        grid_spec=pltpu.PrefetchScalarGridSpec(
            num_scalar_prefetch=0,
            grid=(pl.cdiv(rows, tile_rows),),         # partial tail is masked
            in_specs=[
                pl.BlockSpec((tile_rows, d), lambda i: (i, 0)),
                pl.BlockSpec((1, d), lambda i: (0, 0)),
                pl.BlockSpec((1, d), lambda i: (0, 0)),
            ],
            out_specs=pl.BlockSpec((tile_rows, d), lambda i: (i, 0)),
        ),
        compiler_params=compiler_params,
    )(x2, gamma.reshape(1, d), beta.reshape(1, d))
    return out.reshape(orig_shape)


def _torch_layernorm_ref(x, gamma, beta, eps):
    d = x.shape[-1]
    mean = jnp.mean(x, axis=-1, keepdims=True)
    std = jnp.sqrt(jnp.sum((x - mean) ** 2, axis=-1, keepdims=True) / (d - 1))
    return gamma * (x - mean) / (std + eps) + beta


if __name__ == "__main__":
    key = jax.random.PRNGKey(0)
    B, S, D = 2, 8, 32
    x = jax.random.normal(key, (B, S, D), dtype=jnp.float32)

    # nn.Parameter(torch.ones(embed_dim)) / torch.zeros(embed_dim)
    gamma = jnp.ones((D,), dtype=jnp.float32)
    beta = jnp.zeros((D,), dtype=jnp.float32)

    out = layer_norm(x, gamma, beta, eps=1e-6)       # lane-dense packed path
    jax.block_until_ready(out)
    ref = _torch_layernorm_ref(x, gamma, beta, 1e-6)
    assert jnp.max(jnp.abs(out - ref)) < 1e-5

    # Also exercise the general (D >= 128) path once.
    D2 = 256
    x2 = jax.random.normal(jax.random.PRNGKey(1), (B, S, D2), dtype=jnp.float32)
    g2 = jnp.ones((D2,), dtype=jnp.float32)
    b2 = jnp.zeros((D2,), dtype=jnp.float32)
    out2 = layer_norm(x2, g2, b2, eps=1e-6)
    jax.block_until_ready(out2)
    ref2 = _torch_layernorm_ref(x2, g2, b2, 1e-6)
    assert jnp.max(jnp.abs(out2 - ref2)) < 1e-5

    print("KERNEL_OK")
</pallas_src>

<mosaic_0001>
module attributes {stable_mosaic.version = 11 : i64} {
  func.func @_layernorm_packed_kernel(%arg0: i32, %arg1: memref<4x128xf32, #tpu.memory_space<vmem>>, %arg2: memref<1x128xf32, #tpu.memory_space<vmem>>, %arg3: memref<1x128xf32, #tpu.memory_space<vmem>>, %arg4: memref<128x4xf32, #tpu.memory_space<vmem>>, %arg5: memref<4x128xf32, #tpu.memory_space<vmem>>, %arg6: memref<4x128xf32, #tpu.memory_space<vmem>>) attributes {dimension_semantics = [#tpu.dimension_semantics<parallel>], iteration_bounds = array<i64: 1>, scalar_prefetch = 0 : i64, scratch_operands = 0 : i64, tpu.core_type = #tpu.core_type<tc>, window_params = [{transform_indices = @transform_0, window_bounds = array<i64: 4, 128>}, {pipeline_mode = #tpu.pipeline_mode<synchronous>, transform_indices = @transform_1, window_bounds = array<i64: 1, 128>}, {pipeline_mode = #tpu.pipeline_mode<synchronous>, transform_indices = @transform_2, window_bounds = array<i64: 1, 128>}, {pipeline_mode = #tpu.pipeline_mode<synchronous>, transform_indices = @transform_3, window_bounds = array<i64: 128, 4>}, {pipeline_mode = #tpu.pipeline_mode<synchronous>, transform_indices = @transform_4, window_bounds = array<i64: 4, 128>}, {transform_indices = @transform_5, window_bounds = array<i64: 4, 128>}]} {
    %c0 = arith.constant 0 : index
    %c0_0 = arith.constant 0 : index
    %0 = vector.load %arg1[%c0, %c0_0] : memref<4x128xf32, #tpu.memory_space<vmem>>, vector<4x128xf32>
    %c0_1 = arith.constant 0 : index
    %c0_2 = arith.constant 0 : index
    %1 = vector.load %arg4[%c0_1, %c0_2] : memref<128x4xf32, #tpu.memory_space<vmem>>, vector<128x4xf32>
    %c0_3 = arith.constant 0 : index
    %c0_4 = arith.constant 0 : index
    %2 = vector.load %arg5[%c0_3, %c0_4] : memref<4x128xf32, #tpu.memory_space<vmem>>, vector<4x128xf32>
    %cst = arith.constant dense<0.000000e+00> : vector<4x4xf32>
    %3 = tpu.matmul %0, %1, %cst {dimension_numbers = #tpu.dot_dimension_numbers<[1], [0], [0], [1], [0, 0, 1, 1], [], []>, precision = #tpu.contract_precision<fp32>} : vector<4x128xf32>, vector<128x4xf32>, vector<4x4xf32> -> vector<4x4xf32>
    %cst_5 = arith.constant 3.125000e-02 : f32
    %4 = vector.broadcast %cst_5 : f32 to vector<4x4xf32>
    %5 = arith.mulf %3, %4 : vector<4x4xf32>
    %cst_6 = arith.constant dense<0.000000e+00> : vector<4x128xf32>
    %6 = tpu.matmul %5, %2, %cst_6 {dimension_numbers = #tpu.dot_dimension_numbers<[1], [0], [0], [1], [0, 0, 1, 1], [], []>, precision = #tpu.contract_precision<fp32>} : vector<4x4xf32>, vector<4x128xf32>, vector<4x128xf32> -> vector<4x128xf32>
    %7 = arith.subf %0, %6 : vector<4x128xf32>
    %8 = arith.mulf %7, %7 : vector<4x128xf32>
    %cst_7 = arith.constant dense<0.000000e+00> : vector<4x4xf32>
    %9 = tpu.matmul %8, %1, %cst_7 {dimension_numbers = #tpu.dot_dimension_numbers<[1], [0], [0], [1], [0, 0, 1, 1], [], []>, precision = #tpu.contract_precision<fp32>} : vector<4x128xf32>, vector<128x4xf32>, vector<4x4xf32> -> vector<4x4xf32>
    %cst_8 = arith.constant 0.0322580636 : f32
    %10 = vector.broadcast %cst_8 : f32 to vector<4x4xf32>
    %11 = arith.mulf %9, %10 : vector<4x4xf32>
    %12 = math.sqrt %11 : vector<4x4xf32>
    %cst_9 = arith.constant 9.99999997E-7 : f32
    %13 = vector.broadcast %cst_9 : f32 to vector<4x4xf32>
    %14 = arith.addf %12, %13 : vector<4x4xf32>
    %cst_10 = arith.constant 1.000000e+00 : f32
    %15 = vector.broadcast %cst_10 : f32 to vector<4x4xf32>
    %16 = arith.divf %15, %14 : vector<4x4xf32>
    %cst_11 = arith.constant dense<0.000000e+00> : vector<4x128xf32>
    %17 = tpu.matmul %16, %2, %cst_11 {dimension_numbers = #tpu.dot_dimension_numbers<[1], [0], [0], [1], [0, 0, 1, 1], [], []>, precision = #tpu.contract_precision<fp32>} : vector<4x4xf32>, vector<4x128xf32>, vector<4x128xf32> -> vector<4x128xf32>
    %c0_12 = arith.constant 0 : index
    %c0_13 = arith.constant 0 : index
    %18 = vector.load %arg2[%c0_12, %c0_13] : memref<1x128xf32, #tpu.memory_space<vmem>>, vector<1x128xf32>
    %c0_14 = arith.constant 0 : index
    %c0_15 = arith.constant 0 : index
    %19 = vector.load %arg3[%c0_14, %c0_15] : memref<1x128xf32, #tpu.memory_space<vmem>>, vector<1x128xf32>
    %20 = arith.mulf %7, %17 : vector<4x128xf32>
    %21 = vector.broadcast %18 : vector<1x128xf32> to vector<4x128xf32>
    %22 = arith.mulf %20, %21 : vector<4x128xf32>
    %23 = vector.broadcast %19 : vector<1x128xf32> to vector<4x128xf32>
    %24 = arith.addf %22, %23 : vector<4x128xf32>
    %c0_16 = arith.constant 0 : index
    %c0_17 = arith.constant 0 : index
    %25 = vector.load %arg6[%c0_16, %c0_17] : memref<4x128xf32, #tpu.memory_space<vmem>>, vector<4x128xf32>
    tpu.vector_store %arg6[%c0_16, %c0_17], %24 {strides = array<i32>} : memref<4x128xf32, #tpu.memory_space<vmem>>, vector<4x128xf32>,
    return
  }
  func.func @transform_0(%arg0: i32) -> (i32, i32) {
    %c0_i32 = arith.constant 0 : i32
    %c0_i32_0 = arith.constant 0 : i32
    return %arg0, %c0_i32 : i32, i32
  }
  func.func @transform_1(%arg0: i32) -> (i32, i32) {
    %c0_i32 = arith.constant 0 : i32
    %c0_i32_0 = arith.constant 0 : i32
    %c0_i32_1 = arith.constant 0 : i32
    return %c0_i32, %c0_i32_0 : i32, i32
  }
  func.func @transform_2(%arg0: i32) -> (i32, i32) {
    %c0_i32 = arith.constant 0 : i32
    %c0_i32_0 = arith.constant 0 : i32
    %c0_i32_1 = arith.constant 0 : i32
    return %c0_i32, %c0_i32_0 : i32, i32
  }
  func.func @transform_3(%arg0: i32) -> (i32, i32) {
    %c0_i32 = arith.constant 0 : i32
    %c0_i32_0 = arith.constant 0 : i32
    %c0_i32_1 = arith.constant 0 : i32
    return %c0_i32, %c0_i32_0 : i32, i32
  }
  func.func @transform_4(%arg0: i32) -> (i32, i32) {
    %c0_i32 = arith.constant 0 : i32
    %c0_i32_0 = arith.constant 0 : i32
    %c0_i32_1 = arith.constant 0 : i32
    return %c0_i32, %c0_i32_0 : i32, i32
  }
  func.func @transform_5(%arg0: i32) -> (i32, i32) {
    %c0_i32 = arith.constant 0 : i32
    %c0_i32_0 = arith.constant 0 : i32
    return %arg0, %c0_i32 : i32, i32
  }
}

</mosaic_0001>

<llo_original>
// kernel: tpu_custom_call.1
$region0: #{tpu_custom_call.1}
  #allocation0 [shape = 'u32[]', space=smem, size = 0x4, offset = 0x4, fixed_abs, tag = 'smem constant byte address 0x4 - core index']
  #allocation1 [shape = 'u32[144,128]{1,0:T(1,128)}', space=vmem, size = 0x12000, scoped, tag = 'internal scratch']
  %s0 = inlined_call_operand.vmem [shape: f32[4,128], index: 0, kind: input, shape index: {}]
  %s1 = inlined_call_operand.vmem [shape: f32[1,128], index: 1, kind: input, shape index: {}]
  %s2 = inlined_call_operand.vmem [shape: f32[1,128], index: 2, kind: input, shape index: {}]
  %s3 = inlined_call_operand.vmem [shape: f32[128,4], index: 3, kind: input, shape index: {}]
  %s4 = inlined_call_operand.vmem [shape: f32[4,128], index: 4, kind: input, shape index: {}]
  %s5 = inlined_call_operand.hbm [shape: f32[4,128], index: 5, kind: output, shape index: {}]
  %s6 = sld [smem:[#allocation0]]
  $region30: #{tpu_custom_call.1} parent=0
    _
  %s8 = ssub.s32 1, %s6
  %s9 = scalar_select 0, %s8, %s6
  $region1: #{tpu_custom_call.1} parent=0
    #allocation2 [shape = 'u8[2048]{0}', space=vmem, size = 0x800, scoped, tag = 'output window, operand 0, single buffered']
    #allocation3 [shape = 's32[1]{0}', space=sflag, size = 0x4, scoped, tag = 'scoped memory for tpu_custom_call.1']
    %10 = vsyncpa [#allocation3], 0
    // Predicated region
    $region2: #{tpu_custom_call.1} parent=1 // pred_check
      _
    $region3: #{tpu_custom_call.1} parent=1 // pred_check_branch
      %12 = sbr.rel (0) target = $region5
    $region4: #{tpu_custom_call.1} parent=1 // pred_region
      _
    $region5: #{tpu_custom_call.1} parent=1 // pred_fallthru
      _
    // Predicated region
    $region6: #{tpu_custom_call.1} parent=1 // pred_check
      _
    $region7: #{tpu_custom_call.1} parent=1 // pred_check_branch
      %14 = sbr.rel (0) target = $region9
    $region8: #{tpu_custom_call.1} parent=1 // pred_region
      _
    $region9: #{tpu_custom_call.1} parent=1 // pred_fallthru
      _
    // Predicated region
    $region10: #{tpu_custom_call.1} parent=1 // pred_check
      _
    $region11: #{tpu_custom_call.1} parent=1 // pred_check_branch
      %16 = sbr.rel (0) target = $region13
    $region12: #{tpu_custom_call.1} parent=1 // pred_region
      _
    $region13: #{tpu_custom_call.1} parent=1 // pred_fallthru
      _
    // Predicated region
    $region14: #{tpu_custom_call.1} parent=1 // pred_check
      _
    $region15: #{tpu_custom_call.1} parent=1 // pred_check_branch
      %18 = sbr.rel (0) target = $region17
    $region16: #{tpu_custom_call.1} parent=1 // pred_region
      _
    $region17: #{tpu_custom_call.1} parent=1 // pred_fallthru
      _
    // Predicated region
    $region18: #{tpu_custom_call.1} parent=1 // pred_check
      _
    $region19: #{tpu_custom_call.1} parent=1 // pred_check_branch
      %20 = sbr.rel (0) target = $region21
    $region20: #{tpu_custom_call.1} parent=1 // pred_region
      _
    $region21: #{tpu_custom_call.1} parent=1 // pred_fallthru
      _
    %v21 = vld [vmem:[%s0] sm:$0xf]
    %v22 = vld [vmem:[%s3] sm:$0xff]
    %v23 = vld [vmem:[%s3 + $0x8] sm:$0xff]
    %v24 = vld [vmem:[%s3 + $0x10] sm:$0xff]
    %v25 = vld [vmem:[%s3 + $0x18] sm:$0xff]
    %v26 = vld [vmem:[%s3 + $0x20] sm:$0xff]
    %v27 = vld [vmem:[%s3 + $0x28] sm:$0xff]
    %v28 = vld [vmem:[%s3 + $0x30] sm:$0xff]
    %v29 = vld [vmem:[%s3 + $0x38] sm:$0xff]
    %v30 = vld [vmem:[%s3 + $0x40] sm:$0xff]
    %v31 = vld [vmem:[%s3 + $0x48] sm:$0xff]
    %v32 = vld [vmem:[%s3 + $0x50] sm:$0xff]
    %v33 = vld [vmem:[%s3 + $0x58] sm:$0xff]
    %v34 = vld [vmem:[%s3 + $0x60] sm:$0xff]
    %v35 = vld [vmem:[%s3 + $0x68] sm:$0xff]
    %v36 = vld [vmem:[%s3 + $0x70] sm:$0xff]
    %v37 = vld [vmem:[%s3 + $0x78] sm:$0xff]
    %v38 = vld [vmem:[%s4] sm:$0xf]
    %39 = vmatprep.subr.mxu0 0.0
    %v40 = vand.u32 %v22, 4294901760
    %41 = vmatpush1.msra.mxu0 %v40
    %42 = vmatprep.subr.mxu0 0.0
    %v43 = vand.u32 %v23, 4294901760
    %44 = vmatpush1.msra.mxu0 %v43
    %45 = vmatprep.subr.mxu0 0.0
    %v46 = vand.u32 %v24, 4294901760
    %47 = vmatpush1.msra.mxu0 %v46
    %48 = vmatprep.subr.mxu0 0.0
    %v49 = vand.u32 %v25, 4294901760
    %50 = vmatpush1.msra.mxu0 %v49
    %51 = vmatprep.subr.mxu0 0.0
    %v52 = vand.u32 %v26, 4294901760
    %53 = vmatpush1.msra.mxu0 %v52
    %54 = vmatprep.subr.mxu0 0.0
    %v55 = vand.u32 %v27, 4294901760
    %56 = vmatpush1.msra.mxu0 %v55
    %57 = vmatprep.subr.mxu0 0.0
    %v58 = vand.u32 %v28, 4294901760
    %59 = vmatpush1.msra.mxu0 %v58
    %60 = vmatprep.subr.mxu0 0.0
    %v61 = vand.u32 %v29, 4294901760
    %62 = vmatpush1.msra.mxu0 %v61
    %63 = vmatprep.subr.mxu0 0.0
    %v64 = vand.u32 %v30, 4294901760
    %65 = vmatpush1.msra.mxu0 %v64
    %66 = vmatprep.subr.mxu0 0.0
    %v67 = vand.u32 %v31, 4294901760
    %68 = vmatpush1.msra.mxu0 %v67
    %69 = vmatprep.subr.mxu0 0.0
    %v70 = vand.u32 %v32, 4294901760
    %71 = vmatpush1.msra.mxu0 %v70
    %72 = vmatprep.subr.mxu0 0.0
    %v73 = vand.u32 %v33, 4294901760
    %74 = vmatpush1.msra.mxu0 %v73
    %75 = vmatprep.subr.mxu0 0.0
    %v76 = vand.u32 %v34, 4294901760
    %77 = vmatpush1.msra.mxu0 %v76
    %78 = vmatprep.subr.mxu0 0.0
    %v79 = vand.u32 %v35, 4294901760
    %80 = vmatpush1.msra.mxu0 %v79
    %81 = vmatprep.subr.mxu0 0.0
    %v82 = vand.u32 %v36, 4294901760
    %83 = vmatpush1.msra.mxu0 %v82
    %84 = vmatprep.subr.mxu0 0.0
    %v85 = vand.u32 %v37, 4294901760
    %86 = vmatpush1.msra.mxu0 %v85
    %87 = vmatprep.subr.mxu0 0.0
    %88 = vmatpush1.msra.mxu0 0.0
    %89 = vmatprep.subr.mxu0 0.0
    %90 = vmatpush1.msra.mxu0 0.0
    %91 = vmatprep.subr.mxu0 0.0
    %92 = vmatpush1.msra.mxu0 0.0
    %93 = vmatprep.subr.mxu0 0.0
    %94 = vmatpush1.msra.mxu0 0.0
    %95 = vmatprep.subr.mxu0 0.0
    %96 = vmatpush1.msra.mxu0 0.0
    %97 = vmatprep.subr.mxu0 0.0
    %98 = vmatpush1.msra.mxu0 0.0
    %99 = vmatprep.subr.mxu0 0.0
    %100 = vmatpush1.msra.mxu0 0.0
    %101 = vmatprep.subr.mxu0 0.0
    %102 = vmatpush1.msra.mxu0 0.0
    %103 = vmatprep.subr.mxu0 0.0
    %104 = vmatpush1.msra.mxu0 0.0
    %105 = vmatprep.subr.mxu0 0.0
    %106 = vmatpush1.msra.mxu0 0.0
    %107 = vmatprep.subr.mxu0 0.0
    %108 = vmatpush1.msra.mxu0 0.0
    %109 = vmatprep.subr.mxu0 0.0
    %110 = vmatpush1.msra.mxu0 0.0
    %111 = vmatprep.subr.mxu0 0.0
    %112 = vmatpush1.msra.mxu0 0.0
    %113 = vmatprep.subr.mxu0 0.0
    %114 = vmatpush1.msra.mxu0 0.0
    %115 = vmatprep.subr.mxu0 0.0
    %116 = vmatpush1.msra.mxu0 0.0
    %117 = vmatprep.subr.mxu0 0.0
    %118 = vmatpush1.msra.mxu0 0.0
    %119 = vmatprep.mubr.f32.mxu0 0.0
    %v120 = vand.u32 %v21, 4294901760
    %v121 = vsub.f32 %v21, %v120
    %v122 = vand.u32 %v121, 4294901760
    %v123 = vsub.f32 %v121, %v122
    %v124 = vand.u32 %v123, 4294901760
    %125 = vmatmul.mubr.f32.gmra.mrb[0].mxu0 %v124
    %v126 = vpop.f32.mrb[0].mxu0
    %v127 = vadd.f32 0.0, %v126
    %v128 = vpop.f32.mrb[0].mxu0
    %129 = vdwg.mxu0
    %130 = vmatprep.subr.mxu0 0.0
    %v131 = vand.u32 %v22, 4294901760
    %v132 = vsub.f32 %v22, %v131
    %v133 = vand.u32 %v132, 4294901760
    %v134 = vsub.f32 %v132, %v133
    %v135 = vand.u32 %v134, 4294901760
    %136 = vmatpush1.msra.mxu0 %v135
    %137 = vmatprep.subr.mxu0 0.0
    %v138 = vand.u32 %v23, 4294901760
    %v139 = vsub.f32 %v23, %v138
    %v140 = vand.u32 %v139, 4294901760
    %v141 = vsub.f32 %v139, %v140
    %v142 = vand.u32 %v141, 4294901760
    %143 = vmatpush1.msra.mxu0 %v142
    %144 = vmatprep.subr.mxu0 0.0
    %v145 = vand.u32 %v24, 4294901760
    %v146 = vsub.f32 %v24, %v145
    %v147 = vand.u32 %v146, 4294901760
    %v148 = vsub.f32 %v146, %v147
    %v149 = vand.u32 %v148, 4294901760
    %150 = vmatpush1.msra.mxu0 %v149
    %151 = vmatprep.subr.mxu0 0.0
    %v152 = vand.u32 %v25, 4294901760
    %v153 = vsub.f32 %v25, %v152
    %v154 = vand.u32 %v153, 4294901760
    %v155 = vsub.f32 %v153, %v154
    %v156 = vand.u32 %v155, 4294901760
    %157 = vmatpush1.msra.mxu0 %v156
    %158 = vmatprep.subr.mxu0 0.0
    %v159 = vand.u32 %v26, 4294901760
    %v160 = vsub.f32 %v26, %v159
    %v161 = vand.u32 %v160, 4294901760
    %v162 = vsub.f32 %v160, %v161
    %v163 = vand.u32 %v162, 4294901760
    %164 = vmatpush1.msra.mxu0 %v163
    %165 = vmatprep.subr.mxu0 0.0
    %v166 = vand.u32 %v27, 4294901760
    %v167 = vsub.f32 %v27, %v166
    %v168 = vand.u32 %v167, 4294901760
    %v169 = vsub.f32 %v167, %v168
    %v170 = vand.u32 %v169, 4294901760
    %171 = vmatpush1.msra.mxu0 %v170
    %172 = vmatprep.subr.mxu0 0.0
    %v173 = vand.u32 %v28, 4294901760
    %v174 = vsub.f32 %v28, %v173
    %v175 = vand.u32 %v174, 4294901760
    %v176 = vsub.f32 %v174, %v175
    %v177 = vand.u32 %v176, 4294901760
    %178 = vmatpush1.msra.mxu0 %v177
    %179 = vmatprep.subr.mxu0 0.0
    %v180 = vand.u32 %v29, 4294901760
    %v181 = vsub.f32 %v29, %v180
    %v182 = vand.u32 %v181, 4294901760
    %v183 = vsub.f32 %v181, %v182
    %v184 = vand.u32 %v183, 4294901760
    %185 = vmatpush1.msra.mxu0 %v184
    %186 = vmatprep.subr.mxu0 0.0
    %v187 = vand.u32 %v30, 4294901760
    %v188 = vsub.f32 %v30, %v187
    %v189 = vand.u32 %v188, 4294901760
    %v190 = vsub.f32 %v188, %v189
    %v191 = vand.u32 %v190, 4294901760
    %192 = vmatpush1.msra.mxu0 %v191
    %193 = vmatprep.subr.mxu0 0.0
    %v194 = vand.u32 %v31, 4294901760
    %v195 = vsub.f32 %v31, %v194
    %v196 = vand.u32 %v195, 4294901760
    %v197 = vsub.f32 %v195, %v196
    %v198 = vand.u32 %v197, 4294901760
    %199 = vmatpush1.msra.mxu0 %v198
    %200 = vmatprep.subr.mxu0 0.0
    %v201 = vand.u32 %v32, 4294901760
    %v202 = vsub.f32 %v32, %v201
    %v203 = vand.u32 %v202, 4294901760
    %v204 = vsub.f32 %v202, %v203
    %v205 = vand.u32 %v204, 4294901760
    %206 = vmatpush1.msra.mxu0 %v205
    %207 = vmatprep.subr.mxu0 0.0
    %v208 = vand.u32 %v33, 4294901760
    %v209 = vsub.f32 %v33, %v208
    %v210 = vand.u32 %v209, 4294901760
    %v211 = vsub.f32 %v209, %v210
    %v212 = vand.u32 %v211, 4294901760
    %213 = vmatpush1.msra.mxu0 %v212
    %214 = vmatprep.subr.mxu0 0.0
    %v215 = vand.u32 %v34, 4294901760
    %v216 = vsub.f32 %v34, %v215
    %v217 = vand.u32 %v216, 4294901760
    %v218 = vsub.f32 %v216, %v217
    %v219 = vand.u32 %v218, 4294901760
    %220 = vmatpush1.msra.mxu0 %v219
    %221 = vmatprep.subr.mxu0 0.0
    %v222 = vand.u32 %v35, 4294901760
    %v223 = vsub.f32 %v35, %v222
    %v224 = vand.u32 %v223, 4294901760
    %v225 = vsub.f32 %v223, %v224
    %v226 = vand.u32 %v225, 4294901760
    %227 = vmatpush1.msra.mxu0 %v226
    %228 = vmatprep.subr.mxu0 0.0
    %v229 = vand.u32 %v36, 4294901760
    %v230 = vsub.f32 %v36, %v229
    %v231 = vand.u32 %v230, 4294901760
    %v232 = vsub.f32 %v230, %v231
    %v233 = vand.u32 %v232, 4294901760
    %234 = vmatpush1.msra.mxu0 %v233
    %235 = vmatprep.subr.mxu0 0.0
    %v236 = vand.u32 %v37, 4294901760
    %v237 = vsub.f32 %v37, %v236
    %v238 = vand.u32 %v237, 4294901760
    %v239 = vsub.f32 %v237, %v238
    %v240 = vand.u32 %v239, 4294901760
    %241 = vmatpush1.msra.mxu0 %v240
    %242 = vmatprep.subr.mxu0 0.0
    %243 = vmatpush1.msra.mxu0 0.0
    %244 = vmatprep.subr.mxu0 0.0
    %245 = vmatpush1.msra.mxu0 0.0
    %246 = vmatprep.subr.mxu0 0.0
    %247 = vmatpush1.msra.mxu0 0.0
    %248 = vmatprep.subr.mxu0 0.0
    %249 = vmatpush1.msra.mxu0 0.0
    %250 = vmatprep.subr.mxu0 0.0
    %251 = vmatpush1.msra.mxu0 0.0
    %252 = vmatprep.subr.mxu0 0.0
    %253 = vmatpush1.msra.mxu0 0.0
    %254 = vmatprep.subr.mxu0 0.0
    %255 = vmatpush1.msra.mxu0 0.0
    %256 = vmatprep.subr.mxu0 0.0
    %257 = vmatpush1.msra.mxu0 0.0
    %258 = vmatprep.subr.mxu0 0.0
    %259 = vmatpush1.msra.mxu0 0.0
    %260 = vmatprep.subr.mxu0 0.0
    %261 = vmatpush1.msra.mxu0 0.0
    %262 = vmatprep.subr.mxu0 0.0
    %263 = vmatpush1.msra.mxu0 0.0
    %264 = vmatprep.subr.mxu0 0.0
    %265 = vmatpush1.msra.mxu0 0.0
    %266 = vmatprep.subr.mxu0 0.0
    %267 = vmatpush1.msra.mxu0 0.0
    %268 = vmatprep.subr.mxu0 0.0
    %269 = vmatpush1.msra.mxu0 0.0
    %270 = vmatprep.subr.mxu0 0.0
    %271 = vmatpush1.msra.mxu0 0.0
    %272 = vmatprep.subr.mxu0 0.0
    %273 = vmatpush1.msra.mxu0 0.0
    %274 = vmatprep.mubr.f32.mxu0 0.0
    %v275 = vand.u32 %v21, 4294901760
    %276 = vmatmul.mubr.f32.gmra.mrb[0].mxu0 %v275
    %v277 = vpop.f32.mrb[0].mxu0
    %v278 = vadd.f32 %v127, %v277
    %v279 = vpop.f32.mrb[0].mxu0
    %280 = vdwg.mxu0
    %281 = vmatprep.subr.mxu0 0.0
    %v282 = vand.u32 %v22, 4294901760
    %v283 = vsub.f32 %v22, %v282
    %284 = vmatpush1.msra.mxu0 %v283
    %285 = vmatprep.subr.mxu0 0.0
    %v286 = vand.u32 %v23, 4294901760
    %v287 = vsub.f32 %v23, %v286
    %288 = vmatpush1.msra.mxu0 %v287
    %289 = vmatprep.subr.mxu0 0.0
    %v290 = vand.u32 %v24, 4294901760
    %v291 = vsub.f32 %v24, %v290
    %292 = vmatpush1.msra.mxu0 %v291
    %293 = vmatprep.subr.mxu0 0.0
    %v294 = vand.u32 %v25, 4294901760
    %v295 = vsub.f32 %v25, %v294
    %296 = vmatpush1.msra.mxu0 %v295
    %297 = vmatprep.subr.mxu0 0.0
    %v298 = vand.u32 %v26, 4294901760
    %v299 = vsub.f32 %v26, %v298
    %300 = vmatpush1.msra.mxu0 %v299
    %301 = vmatprep.subr.mxu0 0.0
    %v302 = vand.u32 %v27, 4294901760
    %v303 = vsub.f32 %v27, %v302
    %304 = vmatpush1.msra.mxu0 %v303
    %305 = vmatprep.subr.mxu0 0.0
    %v306 = vand.u32 %v28, 4294901760
    %v307 = vsub.f32 %v28, %v306
    %308 = vmatpush1.msra.mxu0 %v307
    %309 = vmatprep.subr.mxu0 0.0
    %v310 = vand.u32 %v29, 4294901760
    %v311 = vsub.f32 %v29, %v310
    %312 = vmatpush1.msra.mxu0 %v311
    %313 = vmatprep.subr.mxu0 0.0
    %v314 = vand.u32 %v30, 4294901760
    %v315 = vsub.f32 %v30, %v314
    %316 = vmatpush1.msra.mxu0 %v315
    %317 = vmatprep.subr.mxu0 0.0
    %v318 = vand.u32 %v31, 4294901760
    %v319 = vsub.f32 %v31, %v318
    %320 = vmatpush1.msra.mxu0 %v319
    %321 = vmatprep.subr.mxu0 0.0
    %v322 = vand.u32 %v32, 4294901760
    %v323 = vsub.f32 %v32, %v322
    %324 = vmatpush1.msra.mxu0 %v323
    %325 = vmatprep.subr.mxu0 0.0
    %v326 = vand.u32 %v33, 4294901760
    %v327 = vsub.f32 %v33, %v326
    %328 = vmatpush1.msra.mxu0 %v327
    %329 = vmatprep.subr.mxu0 0.0
    %v330 = vand.u32 %v34, 4294901760
    %v331 = vsub.f32 %v34, %v330
    %332 = vmatpush1.msra.mxu0 %v331
    %333 = vmatprep.subr.mxu0 0.0
    %v334 = vand.u32 %v35, 4294901760
    %v335 = vsub.f32 %v35, %v334
    %336 = vmatpush1.msra.mxu0 %v335
    %337 = vmatprep.subr.mxu0 0.0
    %v338 = vand.u32 %v36, 4294901760
    %v339 = vsub.f32 %v36, %v338
    %340 = vmatpush1.msra.mxu0 %v339
    %341 = vmatprep.subr.mxu0 0.0
    %v342 = vand.u32 %v37, 4294901760
    %v343 = vsub.f32 %v37, %v342
    %344 = vmatpush1.msra.mxu0 %v343
    %345 = vmatprep.subr.mxu0 0.0
    %346 = vmatpush1.msra.mxu0 0.0
    %347 = vmatprep.subr.mxu0 0.0
    %348 = vmatpush1.msra.mxu0 0.0
    %349 = vmatprep.subr.mxu0 0.0
    %350 = vmatpush1.msra.mxu0 0.0
    %351 = vmatprep.subr.mxu0 0.0
    %352 = vmatpush1.msra.mxu0 0.0
    %353 = vmatprep.subr.mxu0 0.0
    %354 = vmatpush1.msra.mxu0 0.0
    %355 = vmatprep.subr.mxu0 0.0
    %356 = vmatpush1.msra.mxu0 0.0
    %357 = vmatprep.subr.mxu0 0.0
    %358 = vmatpush1.msra.mxu0 0.0
    %359 = vmatprep.subr.mxu0 0.0
    %360 = vmatpush1.msra.mxu0 0.0
    %361 = vmatprep.subr.mxu0 0.0
    %362 = vmatpush1.msra.mxu0 0.0
    %363 = vmatprep.subr.mxu0 0.0
    %364 = vmatpush1.msra.mxu0 0.0
    %365 = vmatprep.subr.mxu0 0.0
    %366 = vmatpush1.msra.mxu0 0.0
    %367 = vmatprep.subr.mxu0 0.0
    %368 = vmatpush1.msra.mxu0 0.0
    %369 = vmatprep.subr.mxu0 0.0
    %370 = vmatpush1.msra.mxu0 0.0
    %371 = vmatprep.subr.mxu0 0.0
    %372 = vmatpush1.msra.mxu0 0.0
    %373 = vmatprep.subr.mxu0 0.0
    %374 = vmatpush1.msra.mxu0 0.0
    %375 = vmatprep.subr.mxu0 0.0
    %376 = vmatpush1.msra.mxu0 0.0
    %377 = vmatprep.mubr.f32.mxu0 0.0
    %v378 = vand.u32 %v21, 4294901760
    %v379 = vsub.f32 %v21, %v378
    %380 = vmatmul.mubr.f32.gmra.mrb[0].mxu0 %v379
    %v381 = vpop.f32.mrb[0].mxu0
    %v382 = vadd.f32 %v278, %v381
    %v383 = vpop.f32.mrb[0].mxu0
    %384 = vdwg.mxu0
    %385 = vmatprep.subr.mxu0 0.0
    %v386 = vand.u32 %v22, 4294901760
    %387 = vmatpush1.msra.mxu0 %v386
    %388 = vmatprep.subr.mxu0 0.0
    %v389 = vand.u32 %v23, 4294901760
    %390 = vmatpush1.msra.mxu0 %v389
    %391 = vmatprep.subr.mxu0 0.0
    %v392 = vand.u32 %v24, 4294901760
    %393 = vmatpush1.msra.mxu0 %v392
    %394 = vmatprep.subr.mxu0 0.0
    %v395 = vand.u32 %v25, 4294901760
    %396 = vmatpush1.msra.mxu0 %v395
    %397 = vmatprep.subr.mxu0 0.0
    %v398 = vand.u32 %v26, 4294901760
    %399 = vmatpush1.msra.mxu0 %v398
    %400 = vmatprep.subr.mxu0 0.0
    %v401 = vand.u32 %v27, 4294901760
    %402 = vmatpush1.msra.mxu0 %v401
    %403 = vmatprep.subr.mxu0 0.0
    %v404 = vand.u32 %v28, 4294901760
    %405 = vmatpush1.msra.mxu0 %v404
    %406 = vmatprep.subr.mxu0 0.0
    %v407 = vand.u32 %v29, 4294901760
    %408 = vmatpush1.msra.mxu0 %v407
    %409 = vmatprep.subr.mxu0 0.0
    %v410 = vand.u32 %v30, 4294901760
    %411 = vmatpush1.msra.mxu0 %v410
    %412 = vmatprep.subr.mxu0 0.0
    %v413 = vand.u32 %v31, 4294901760
    %414 = vmatpush1.msra.mxu0 %v413
    %415 = vmatprep.subr.mxu0 0.0
    %v416 = vand.u32 %v32, 4294901760
    %417 = vmatpush1.msra.mxu0 %v416
    %418 = vmatprep.subr.mxu0 0.0
    %v419 = vand.u32 %v33, 4294901760
    %420 = vmatpush1.msra.mxu0 %v419
    %421 = vmatprep.subr.mxu0 0.0
    %v422 = vand.u32 %v34, 4294901760
    %423 = vmatpush1.msra.mxu0 %v422
    %424 = vmatprep.subr.mxu0 0.0
    %v425 = vand.u32 %v35, 4294901760
    %426 = vmatpush1.msra.mxu0 %v425
    %427 = vmatprep.subr.mxu0 0.0
    %v428 = vand.u32 %v36, 4294901760
    %429 = vmatpush1.msra.mxu0 %v428
    %430 = vmatprep.subr.mxu0 0.0
    %v431 = vand.u32 %v37, 4294901760
    %432 = vmatpush1.msra.mxu0 %v431
    %433 = vmatprep.subr.mxu0 0.0
    %434 = vmatpush1.msra.mxu0 0.0
    %435 = vmatprep.subr.mxu0 0.0
    %436 = vmatpush1.msra.mxu0 0.0
    %437 = vmatprep.subr.mxu0 0.0
    %438 = vmatpush1.msra.mxu0 0.0
    %439 = vmatprep.subr.mxu0 0.0
    %440 = vmatpush1.msra.mxu0 0.0
    %441 = vmatprep.subr.mxu0 0.0
    %442 = vmatpush1.msra.mxu0 0.0
    %443 = vmatprep.subr.mxu0 0.0
    %444 = vmatpush1.msra.mxu0 0.0
    %445 = vmatprep.subr.mxu0 0.0
    %446 = vmatpush1.msra.mxu0 0.0
    %447 = vmatprep.subr.mxu0 0.0
    %448 = vmatpush1.msra.mxu0 0.0
    %449 = vmatprep.subr.mxu0 0.0
    %450 = vmatpush1.msra.mxu0 0.0
    %451 = vmatprep.subr.mxu0 0.0
    %452 = vmatpush1.msra.mxu0 0.0
    %453 = vmatprep.subr.mxu0 0.0
    %454 = vmatpush1.msra.mxu0 0.0
    %455 = vmatprep.subr.mxu0 0.0
    %456 = vmatpush1.msra.mxu0 0.0
    %457 = vmatprep.subr.mxu0 0.0
    %458 = vmatpush1.msra.mxu0 0.0
    %459 = vmatprep.subr.mxu0 0.0
    %460 = vmatpush1.msra.mxu0 0.0
    %461 = vmatprep.subr.mxu0 0.0
    %462 = vmatpush1.msra.mxu0 0.0
    %463 = vmatprep.subr.mxu0 0.0
    %464 = vmatpush1.msra.mxu0 0.0
    %465 = vmatprep.mubr.f32.mxu0 0.0
    %v466 = vand.u32 %v21, 4294901760
    %v467 = vsub.f32 %v21, %v466
    %v468 = vand.u32 %v467, 4294901760
    %469 = vmatmul.mubr.f32.gmra.mrb[0].mxu0 %v468
    %v470 = vpop.f32.mrb[0].mxu0
    %v471 = vadd.f32 %v382, %v470
    %v472 = vpop.f32.mrb[0].mxu0
    %473 = vdwg.mxu0
    %474 = vmatprep.subr.mxu0 0.0
    %v475 = vand.u32 %v22, 4294901760
    %v476 = vsub.f32 %v22, %v475
    %v477 = vand.u32 %v476, 4294901760
    %478 = vmatpush1.msra.mxu0 %v477
    %479 = vmatprep.subr.mxu0 0.0
    %v480 = vand.u32 %v23, 4294901760
    %v481 = vsub.f32 %v23, %v480
    %v482 = vand.u32 %v481, 4294901760
    %483 = vmatpush1.msra.mxu0 %v482
    %484 = vmatprep.subr.mxu0 0.0
    %v485 = vand.u32 %v24, 4294901760
    %v486 = vsub.f32 %v24, %v485
    %v487 = vand.u32 %v486, 4294901760
    %488 = vmatpush1.msra.mxu0 %v487
    %489 = vmatprep.subr.mxu0 0.0
    %v490 = vand.u32 %v25, 4294901760
    %v491 = vsub.f32 %v25, %v490
    %v492 = vand.u32 %v491, 4294901760
    %493 = vmatpush1.msra.mxu0 %v492
    %494 = vmatprep.subr.mxu0 0.0
    %v495 = vand.u32 %v26, 4294901760
    %v496 = vsub.f32 %v26, %v495
    %v497 = vand.u32 %v496, 4294901760
    %498 = vmatpush1.msra.mxu0 %v497
    %499 = vmatprep.subr.mxu0 0.0
    %v500 = vand.u32 %v27, 4294901760
    %v501 = vsub.f32 %v27, %v500
    %v502 = vand.u32 %v501, 4294901760
    %503 = vmatpush1.msra.mxu0 %v502
    %504 = vmatprep.subr.mxu0 0.0
    %v505 = vand.u32 %v28, 4294901760
    %v506 = vsub.f32 %v28, %v505
    %v507 = vand.u32 %v506, 4294901760
    %508 = vmatpush1.msra.mxu0 %v507
    %509 = vmatprep.subr.mxu0 0.0
    %v510 = vand.u32 %v29, 4294901760
    %v511 = vsub.f32 %v29, %v510
    %v512 = vand.u32 %v511, 4294901760
    %513 = vmatpush1.msra.mxu0 %v512
    %514 = vmatprep.subr.mxu0 0.0
    %v515 = vand.u32 %v30, 4294901760
    %v516 = vsub.f32 %v30, %v515
    %v517 = vand.u32 %v516, 4294901760
    %518 = vmatpush1.msra.mxu0 %v517
    %519 = vmatprep.subr.mxu0 0.0
    %v520 = vand.u32 %v31, 4294901760
    %v521 = vsub.f32 %v31, %v520
    %v522 = vand.u32 %v521, 4294901760
    %523 = vmatpush1.msra.mxu0 %v522
    %524 = vmatprep.subr.mxu0 0.0
    %v525 = vand.u32 %v32, 4294901760
    %v526 = vsub.f32 %v32, %v525
    %v527 = vand.u32 %v526, 4294901760
    %528 = vmatpush1.msra.mxu0 %v527
    %529 = vmatprep.subr.mxu0 0.0
    %v530 = vand.u32 %v33, 4294901760
    %v531 = vsub.f32 %v33, %v530
    %v532 = vand.u32 %v531, 4294901760
    %533 = vmatpush1.msra.mxu0 %v532
    %534 = vmatprep.subr.mxu0 0.0
    %v535 = vand.u32 %v34, 4294901760
    %v536 = vsub.f32 %v34, %v535
    %v537 = vand.u32 %v536, 4294901760
    %538 = vmatpush1.msra.mxu0 %v537
    %539 = vmatprep.subr.mxu0 0.0
    %v540 = vand.u32 %v35, 4294901760
    %v541 = vsub.f32 %v35, %v540
    %v542 = vand.u32 %v541, 4294901760
    %543 = vmatpush1.msra.mxu0 %v542
    %544 = vmatprep.subr.mxu0 0.0
    %v545 = vand.u32 %v36, 4294901760
    %v546 = vsub.f32 %v36, %v545
    %v547 = vand.u32 %v546, 4294901760
    %548 = vmatpush1.msra.mxu0 %v547
    %549 = vmatprep.subr.mxu0 0.0
    %v550 = vand.u32 %v37, 4294901760
    %v551 = vsub.f32 %v37, %v550
    %v552 = vand.u32 %v551, 4294901760
    %553 = vmatpush1.msra.mxu0 %v552
    %554 = vmatprep.subr.mxu0 0.0
    %555 = vmatpush1.msra.mxu0 0.0
    %556 = vmatprep.subr.mxu0 0.0
    %557 = vmatpush1.msra.mxu0 0.0
    %558 = vmatprep.subr.mxu0 0.0
    %559 = vmatpush1.msra.mxu0 0.0
    %560 = vmatprep.subr.mxu0 0.0
    %561 = vmatpush1.msra.mxu0 0.0
    %562 = vmatprep.subr.mxu0 0.0
    %563 = vmatpush1.msra.mxu0 0.0
    %564 = vmatprep.subr.mxu0 0.0
    %565 = vmatpush1.msra.mxu0 0.0
    %566 = vmatprep.subr.mxu0 0.0
    %567 = vmatpush1.msra.mxu0 0.0
    %568 = vmatprep.subr.mxu0 0.0
    %569 = vmatpush1.msra.mxu0 0.0
    %570 = vmatprep.subr.mxu0 0.0
    %571 = vmatpush1.msra.mxu0 0.0
    %572 = vmatprep.subr.mxu0 0.0
    %573 = vmatpush1.msra.mxu0 0.0
    %574 = vmatprep.subr.mxu0 0.0
    %575 = vmatpush1.msra.mxu0 0.0
    %576 = vmatprep.subr.mxu0 0.0
    %577 = vmatpush1.msra.mxu0 0.0
    %578 = vmatprep.subr.mxu0 0.0
    %579 = vmatpush1.msra.mxu0 0.0
    %580 = vmatprep.subr.mxu0 0.0
    %581 = vmatpush1.msra.mxu0 0.0
    %582 = vmatprep.subr.mxu0 0.0
    %583 = vmatpush1.msra.mxu0 0.0
    %584 = vmatprep.subr.mxu0 0.0
    %585 = vmatpush1.msra.mxu0 0.0
    %586 = vmatprep.mubr.f32.mxu0 0.0
    %v587 = vand.u32 %v21, 4294901760
    %588 = vmatmul.mubr.f32.gmra.mrb[0].mxu0 %v587
    %v589 = vpop.f32.mrb[0].mxu0
    %v590 = vadd.f32 %v471, %v589
    %v591 = vpop.f32.mrb[0].mxu0
    %592 = vdwg.mxu0
    %593 = vmatprep.subr.mxu0 0.0
    %v594 = vand.u32 %v22, 4294901760
    %595 = vmatpush1.msra.mxu0 %v594
    %596 = vmatprep.subr.mxu0 0.0
    %v597 = vand.u32 %v23, 4294901760
    %598 = vmatpush1.msra.mxu0 %v597
    %599 = vmatprep.subr.mxu0 0.0
    %v600 = vand.u32 %v24, 4294901760
    %601 = vmatpush1.msra.mxu0 %v600
    %602 = vmatprep.subr.mxu0 0.0
    %v603 = vand.u32 %v25, 4294901760
    %604 = vmatpush1.msra.mxu0 %v603
    %605 = vmatprep.subr.mxu0 0.0
    %v606 = vand.u32 %v26, 4294901760
    %607 = vmatpush1.msra.mxu0 %v606
    %608 = vmatprep.subr.mxu0 0.0
    %v609 = vand.u32 %v27, 4294901760
    %610 = vmatpush1.msra.mxu0 %v609
    %611 = vmatprep.subr.mxu0 0.0
    %v612 = vand.u32 %v28, 4294901760
    %613 = vmatpush1.msra.mxu0 %v612
    %614 = vmatprep.subr.mxu0 0.0
    %v615 = vand.u32 %v29, 4294901760
    %616 = vmatpush1.msra.mxu0 %v615
    %617 = vmatprep.subr.mxu0 0.0
    %v618 = vand.u32 %v30, 4294901760
    %619 = vmatpush1.msra.mxu0 %v618
    %620 = vmatprep.subr.mxu0 0.0
    %v621 = vand.u32 %v31, 4294901760
    %622 = vmatpush1.msra.mxu0 %v621
    %623 = vmatprep.subr.mxu0 0.0
    %v624 = vand.u32 %v32, 4294901760
    %625 = vmatpush1.msra.mxu0 %v624
    %626 = vmatprep.subr.mxu0 0.0
    %v627 = vand.u32 %v33, 4294901760
    %628 = vmatpush1.msra.mxu0 %v627
    %629 = vmatprep.subr.mxu0 0.0
    %v630 = vand.u32 %v34, 4294901760
    %631 = vmatpush1.msra.mxu0 %v630
    %632 = vmatprep.subr.mxu0 0.0
    %v633 = vand.u32 %v35, 4294901760
    %634 = vmatpush1.msra.mxu0 %v633
    %635 = vmatprep.subr.mxu0 0.0
    %v636 = vand.u32 %v36, 4294901760
    %637 = vmatpush1.msra.mxu0 %v636
    %638 = vmatprep.subr.mxu0 0.0
    %v639 = vand.u32 %v37, 4294901760
    %640 = vmatpush1.msra.mxu0 %v639
    %641 = vmatprep.subr.mxu0 0.0
    %642 = vmatpush1.msra.mxu0 0.0
    %643 = vmatprep.subr.mxu0 0.0
    %644 = vmatpush1.msra.mxu0 0.0
    %645 = vmatprep.subr.mxu0 0.0
    %646 = vmatpush1.msra.mxu0 0.0
    %647 = vmatprep.subr.mxu0 0.0
    %648 = vmatpush1.msra.mxu0 0.0
    %649 = vmatprep.subr.mxu0 0.0
    %650 = vmatpush1.msra.mxu0 0.0
    %651 = vmatprep.subr.mxu0 0.0
    %652 = vmatpush1.msra.mxu0 0.0
    %653 = vmatprep.subr.mxu0 0.0
    %654 = vmatpush1.msra.mxu0 0.0
    %655 = vmatprep.subr.mxu0 0.0
    %656 = vmatpush1.msra.mxu0 0.0
    %657 = vmatprep.subr.mxu0 0.0
    %658 = vmatpush1.msra.mxu0 0.0
    %659 = vmatprep.subr.mxu0 0.0
    %660 = vmatpush1.msra.mxu0 0.0
    %661 = vmatprep.subr.mxu0 0.0
    %662 = vmatpush1.msra.mxu0 0.0
    %663 = vmatprep.subr.mxu0 0.0
    %664 = vmatpush1.msra.mxu0 0.0
    %665 = vmatprep.subr.mxu0 0.0
    %666 = vmatpush1.msra.mxu0 0.0
    %667 = vmatprep.subr.mxu0 0.0
    %668 = vmatpush1.msra.mxu0 0.0
    %669 = vmatprep.subr.mxu0 0.0
    %670 = vmatpush1.msra.mxu0 0.0
    %671 = vmatprep.subr.mxu0 0.0
    %672 = vmatpush1.msra.mxu0 0.0
    %673 = vmatprep.mubr.f32.mxu0 0.0
    %v674 = vand.u32 %v21, 4294901760
    %675 = vmatmul.mubr.f32.gmra.mrb[0].mxu0 %v674
    %v676 = vpop.f32.mrb[0].mxu0
    %v677 = vadd.f32 %v590, %v676
    %v678 = vpop.f32.mrb[0].mxu0
    %679 = vdwg.mxu0
    %v680 = vmul.f32 %v677, 0.03125
    %vm681 = vcmask 31744
    %v683 = vsel %vm681, %v680, 0
    %vm685 = vcmask 1043456
    %v687 = vsel %vm685, %v38, 0
    %689 = vmatprep.subr.mxu0 0.0
    %v690 = vand.u32 %v687, 4294901760
    %691 = vmatpush1.msra.mxu0 %v690
    %692 = vmatprep.subr.mxu0 0.0
    %693 = vmatpush1.msra.mxu0 0.0
    %694 = vmatprep.subr.mxu0 0.0
    %695 = vmatpush1.msra.mxu0 0.0
    %696 = vmatprep.subr.mxu0 0.0
    %697 = vmatpush1.msra.mxu0 0.0
    %698 = vmatprep.subr.mxu0 0.0
    %699 = vmatpush1.msra.mxu0 0.0
    %700 = vmatprep.subr.mxu0 0.0
    %701 = vmatpush1.msra.mxu0 0.0
    %702 = vmatprep.subr.mxu0 0.0
    %703 = vmatpush1.msra.mxu0 0.0
    %704 = vmatprep.subr.mxu0 0.0
    %705 = vmatpush1.msra.mxu0 0.0
    %706 = vmatprep.subr.mxu0 0.0
    %707 = vmatpush1.msra.mxu0 0.0
    %708 = vmatprep.subr.mxu0 0.0
    %709 = vmatpush1.msra.mxu0 0.0
    %710 = vmatprep.subr.mxu0 0.0
    %711 = vmatpush1.msra.mxu0 0.0
    %712 = vmatprep.subr.mxu0 0.0
    %713 = vmatpush1.msra.mxu0 0.0
    %714 = vmatprep.subr.mxu0 0.0
    %715 = vmatpush1.msra.mxu0 0.0
    %716 = vmatprep.subr.mxu0 0.0
    %717 = vmatpush1.msra.mxu0 0.0
    %718 = vmatprep.subr.mxu0 0.0
    %719 = vmatpush1.msra.mxu0 0.0
    %720 = vmatprep.subr.mxu0 0.0
    %721 = vmatpush1.msra.mxu0 0.0
    %722 = vmatprep.subr.mxu0 0.0
    %723 = vmatpush1.msra.mxu0 0.0
    %724 = vmatprep.subr.mxu0 0.0
    %725 = vmatpush1.msra.mxu0 0.0
    %726 = vmatprep.subr.mxu0 0.0
    %727 = vmatpush1.msra.mxu0 0.0
    %728 = vmatprep.subr.mxu0 0.0
    %729 = vmatpush1.msra.mxu0 0.0
    %730 = vmatprep.subr.mxu0 0.0
    %731 = vmatpush1.msra.mxu0 0.0
    %732 = vmatprep.subr.mxu0 0.0
    %733 = vmatpush1.msra.mxu0 0.0
    %734 = vmatprep.subr.mxu0 0.0
    %735 = vmatpush1.msra.mxu0 0.0
    %736 = vmatprep.subr.mxu0 0.0
    %737 = vmatpush1.msra.mxu0 0.0
    %738 = vmatprep.subr.mxu0 0.0
    %739 = vmatpush1.msra.mxu0 0.0
    %740 = vmatprep.subr.mxu0 0.0
    %741 = vmatpush1.msra.mxu0 0.0
    %742 = vmatprep.subr.mxu0 0.0
    %743 = vmatpush1.msra.mxu0 0.0
    %744 = vmatprep.subr.mxu0 0.0
    %745 = vmatpush1.msra.mxu0 0.0
    %746 = vmatprep.subr.mxu0 0.0
    %747 = vmatpush1.msra.mxu0 0.0
    %748 = vmatprep.subr.mxu0 0.0
    %749 = vmatpush1.msra.mxu0 0.0
    %750 = vmatprep.subr.mxu0 0.0
    %751 = vmatpush1.msra.mxu0 0.0
    %752 = vmatprep.subr.mxu0 0.0
    %753 = vmatpush1.msra.mxu0 0.0
    %754 = vmatprep.mubr.f32.mxu0 0.0
    %v755 = vand.u32 %v683, 4294901760
    %v756 = vsub.f32 %v683, %v755
    %v757 = vand.u32 %v756, 4294901760
    %v758 = vsub.f32 %v756, %v757
    %v759 = vand.u32 %v758, 4294901760
    %760 = vmatmul.mubr.f32.gmra.mrb[0].mxu0 %v759
    %v761 = vpop.f32.mrb[0].mxu0
    %v762 = vadd.f32 0.0, %v761
    %v763 = vpop.f32.mrb[0].mxu0
    %764 = vdwg.mxu0
    %765 = vmatprep.subr.mxu0 0.0
    %v766 = vand.u32 %v687, 4294901760
    %v767 = vsub.f32 %v687, %v766
    %v768 = vand.u32 %v767, 4294901760
    %v769 = vsub.f32 %v767, %v768
    %v770 = vand.u32 %v769, 4294901760
    %771 = vmatpush1.msra.mxu0 %v770
    %772 = vmatprep.subr.mxu0 0.0
    %773 = vmatpush1.msra.mxu0 0.0
    %774 = vmatprep.subr.mxu0 0.0
    %775 = vmatpush1.msra.mxu0 0.0
    %776 = vmatprep.subr.mxu0 0.0
    %777 = vmatpush1.msra.mxu0 0.0
    %778 = vmatprep.subr.mxu0 0.0
    %779 = vmatpush1.msra.mxu0 0.0
    %780 = vmatprep.subr.mxu0 0.0
    %781 = vmatpush1.msra.mxu0 0.0
    %782 = vmatprep.subr.mxu0 0.0
    %783 = vmatpush1.msra.mxu0 0.0
    %784 = vmatprep.subr.mxu0 0.0
    %785 = vmatpush1.msra.mxu0 0.0
    %786 = vmatprep.subr.mxu0 0.0
    %787 = vmatpush1.msra.mxu0 0.0
    %788 = vmatprep.subr.mxu0 0.0
    %789 = vmatpush1.msra.mxu0 0.0
    %790 = vmatprep.subr.mxu0 0.0
    %791 = vmatpush1.msra.mxu0 0.0
    %792 = vmatprep.subr.mxu0 0.0
    %793 = vmatpush1.msra.mxu0 0.0
    %794 = vmatprep.subr.mxu0 0.0
    %795 = vmatpush1.msra.mxu0 0.0
    %796 = vmatprep.subr.mxu0 0.0
    %797 = vmatpush1.msra.mxu0 0.0
    %798 = vmatprep.subr.mxu0 0.0
    %799 = vmatpush1.msra.mxu0 0.0
    %800 = vmatprep.subr.mxu0 0.0
    %801 = vmatpush1.msra.mxu0 0.0
    %802 = vmatprep.subr.mxu0 0.0
    %803 = vmatpush1.msra.mxu0 0.0
    %804 = vmatprep.subr.mxu0 0.0
    %805 = vmatpush1.msra.mxu0 0.0
    %806 = vmatprep.subr.mxu0 0.0
    %807 = vmatpush1.msra.mxu0 0.0
    %808 = vmatprep.subr.mxu0 0.0
    %809 = vmatpush1.msra.mxu0 0.0
    %810 = vmatprep.subr.mxu0 0.0
    %811 = vmatpush1.msra.mxu0 0.0
    %812 = vmatprep.subr.mxu0 0.0
    %813 = vmatpush1.msra.mxu0 0.0
    %814 = vmatprep.subr.mxu0 0.0
    %815 = vmatpush1.msra.mxu0 0.0
    %816 = vmatprep.subr.mxu0 0.0
    %817 = vmatpush1.msra.mxu0 0.0
    %818 = vmatprep.subr.mxu0 0.0
    %819 = vmatpush1.msra.mxu0 0.0
    %820 = vmatprep.subr.mxu0 0.0
    %821 = vmatpush1.msra.mxu0 0.0
    %822 = vmatprep.subr.mxu0 0.0
    %823 = vmatpush1.msra.mxu0 0.0
    %824 = vmatprep.subr.mxu0 0.0
    %825 = vmatpush1.msra.mxu0 0.0
    %826 = vmatprep.subr.mxu0 0.0
    %827 = vmatpush1.msra.mxu0 0.0
    %828 = vmatprep.subr.mxu0 0.0
    %829 = vmatpush1.msra.mxu0 0.0
    %830 = vmatprep.subr.mxu0 0.0
    %831 = vmatpush1.msra.mxu0 0.0
    %832 = vmatprep.subr.mxu0 0.0
    %833 = vmatpush1.msra.mxu0 0.0
    %834 = vmatprep.mubr.f32.mxu0 0.0
    %v835 = vand.u32 %v683, 4294901760
    %836 = vmatmul.mubr.f32.gmra.mrb[0].mxu0 %v835
    %v837 = vpop.f32.mrb[0].mxu0
    %v838 = vadd.f32 %v762, %v837
    %v839 = vpop.f32.mrb[0].mxu0
    %840 = vdwg.mxu0
    %841 = vmatprep.subr.mxu0 0.0
    %v842 = vand.u32 %v687, 4294901760
    %v843 = vsub.f32 %v687, %v842
    %844 = vmatpush1.msra.mxu0 %v843
    %845 = vmatprep.subr.mxu0 0.0
    %846 = vmatpush1.msra.mxu0 0.0
    %847 = vmatprep.subr.mxu0 0.0
    %848 = vmatpush1.msra.mxu0 0.0
    %849 = vmatprep.subr.mxu0 0.0
    %850 = vmatpush1.msra.mxu0 0.0
    %851 = vmatprep.subr.mxu0 0.0
    %852 = vmatpush1.msra.mxu0 0.0
    %853 = vmatprep.subr.mxu0 0.0
    %854 = vmatpush1.msra.mxu0 0.0
    %855 = vmatprep.subr.mxu0 0.0
    %856 = vmatpush1.msra.mxu0 0.0
    %857 = vmatprep.subr.mxu0 0.0
    %858 = vmatpush1.msra.mxu0 0.0
    %859 = vmatprep.subr.mxu0 0.0
    %860 = vmatpush1.msra.mxu0 0.0
    %861 = vmatprep.subr.mxu0 0.0
    %862 = vmatpush1.msra.mxu0 0.0
    %863 = vmatprep.subr.mxu0 0.0
    %864 = vmatpush1.msra.mxu0 0.0
    %865 = vmatprep.subr.mxu0 0.0
    %866 = vmatpush1.msra.mxu0 0.0
    %867 = vmatprep.subr.mxu0 0.0
    %868 = vmatpush1.msra.mxu0 0.0
    %869 = vmatprep.subr.mxu0 0.0
    %870 = vmatpush1.msra.mxu0 0.0
    %871 = vmatprep.subr.mxu0 0.0
    %872 = vmatpush1.msra.mxu0 0.0
    %873 = vmatprep.subr.mxu0 0.0
    %874 = vmatpush1.msra.mxu0 0.0
    %875 = vmatprep.subr.mxu0 0.0
    %876 = vmatpush1.msra.mxu0 0.0
    %877 = vmatprep.subr.mxu0 0.0
    %878 = vmatpush1.msra.mxu0 0.0
    %879 = vmatprep.subr.mxu0 0.0
    %880 = vmatpush1.msra.mxu0 0.0
    %881 = vmatprep.subr.mxu0 0.0
    %882 = vmatpush1.msra.mxu0 0.0
    %883 = vmatprep.subr.mxu0 0.0
    %884 = vmatpush1.msra.mxu0 0.0
    %885 = vmatprep.subr.mxu0 0.0
    %886 = vmatpush1.msra.mxu0 0.0
    %887 = vmatprep.subr.mxu0 0.0
    %888 = vmatpush1.msra.mxu0 0.0
    %889 = vmatprep.subr.mxu0 0.0
    %890 = vmatpush1.msra.mxu0 0.0
    %891 = vmatprep.subr.mxu0 0.0
    %892 = vmatpush1.msra.mxu0 0.0
    %893 = vmatprep.subr.mxu0 0.0
    %894 = vmatpush1.msra.mxu0 0.0
    %895 = vmatprep.subr.mxu0 0.0
    %896 = vmatpush1.msra.mxu0 0.0
    %897 = vmatprep.subr.mxu0 0.0
    %898 = vmatpush1.msra.mxu0 0.0
    %899 = vmatprep.subr.mxu0 0.0
    %900 = vmatpush1.msra.mxu0 0.0
    %901 = vmatprep.subr.mxu0 0.0
    %902 = vmatpush1.msra.mxu0 0.0
    %903 = vmatprep.subr.mxu0 0.0
    %904 = vmatpush1.msra.mxu0 0.0
    %905 = vmatprep.subr.mxu0 0.0
    %906 = vmatpush1.msra.mxu0 0.0
    %907 = vmatprep.mubr.f32.mxu0 0.0
    %v908 = vand.u32 %v683, 4294901760
    %v909 = vsub.f32 %v683, %v908
    %910 = vmatmul.mubr.f32.gmra.mrb[0].mxu0 %v909
    %v911 = vpop.f32.mrb[0].mxu0
    %v912 = vadd.f32 %v838, %v911
    %v913 = vpop.f32.mrb[0].mxu0
    %914 = vdwg.mxu0
    %915 = vmatprep.subr.mxu0 0.0
    %v916 = vand.u32 %v687, 4294901760
    %917 = vmatpush1.msra.mxu0 %v916
    %918 = vmatprep.subr.mxu0 0.0
    %919 = vmatpush1.msra.mxu0 0.0
    %920 = vmatprep.subr.mxu0 0.0
    %921 = vmatpush1.msra.mxu0 0.0
    %922 = vmatprep.subr.mxu0 0.0
    %923 = vmatpush1.msra.mxu0 0.0
    %924 = vmatprep.subr.mxu0 0.0
    %925 = vmatpush1.msra.mxu0 0.0
    %926 = vmatprep.subr.mxu0 0.0
    %927 = vmatpush1.msra.mxu0 0.0
    %928 = vmatprep.subr.mxu0 0.0
    %929 = vmatpush1.msra.mxu0 0.0
    %930 = vmatprep.subr.mxu0 0.0
    %931 = vmatpush1.msra.mxu0 0.0
    %932 = vmatprep.subr.mxu0 0.0
    %933 = vmatpush1.msra.mxu0 0.0
    %934 = vmatprep.subr.mxu0 0.0
    %935 = vmatpush1.msra.mxu0 0.0
    %936 = vmatprep.subr.mxu0 0.0
    %937 = vmatpush1.msra.mxu0 0.0
    %938 = vmatprep.subr.mxu0 0.0
    %939 = vmatpush1.msra.mxu0 0.0
    %940 = vmatprep.subr.mxu0 0.0
    %941 = vmatpush1.msra.mxu0 0.0
    %942 = vmatprep.subr.mxu0 0.0
    %943 = vmatpush1.msra.mxu0 0.0
    %944 = vmatprep.subr.mxu0 0.0
    %945 = vmatpush1.msra.mxu0 0.0
    %946 = vmatprep.subr.mxu0 0.0
    %947 = vmatpush1.msra.mxu0 0.0
    %948 = vmatprep.subr.mxu0 0.0
    %949 = vmatpush1.msra.mxu0 0.0
    %950 = vmatprep.subr.mxu0 0.0
    %951 = vmatpush1.msra.mxu0 0.0
    %952 = vmatprep.subr.mxu0 0.0
    %953 = vmatpush1.msra.mxu0 0.0
    %954 = vmatprep.subr.mxu0 0.0
    %955 = vmatpush1.msra.mxu0 0.0
    %956 = vmatprep.subr.mxu0 0.0
    %957 = vmatpush1.msra.mxu0 0.0
    %958 = vmatprep.subr.mxu0 0.0
    %959 = vmatpush1.msra.mxu0 0.0
    %960 = vmatprep.subr.mxu0 0.0
    %961 = vmatpush1.msra.mxu0 0.0
    %962 = vmatprep.subr.mxu0 0.0
    %963 = vmatpush1.msra.mxu0 0.0
    %964 = vmatprep.subr.mxu0 0.0
    %965 = vmatpush1.msra.mxu0 0.0
    %966 = vmatprep.subr.mxu0 0.0
    %967 = vmatpush1.msra.mxu0 0.0
    %968 = vmatprep.subr.mxu0 0.0
    %969 = vmatpush1.msra.mxu0 0.0
    %970 = vmatprep.subr.mxu0 0.0
    %971 = vmatpush1.msra.mxu0 0.0
    %972 = vmatprep.subr.mxu0 0.0
    %973 = vmatpush1.msra.mxu0 0.0
    %974 = vmatprep.subr.mxu0 0.0
    %975 = vmatpush1.msra.mxu0 0.0
    %976 = vmatprep.subr.mxu0 0.0
    %977 = vmatpush1.msra.mxu0 0.0
    %978 = vmatprep.subr.mxu0 0.0
    %979 = vmatpush1.msra.mxu0 0.0
    %980 = vmatprep.mubr.f32.mxu0 0.0
    %v981 = vand.u32 %v683, 4294901760
    %v982 = vsub.f32 %v683, %v981
    %v983 = vand.u32 %v982, 4294901760
    %984 = vmatmul.mubr.f32.gmra.mrb[0].mxu0 %v983
    %v985 = vpop.f32.mrb[0].mxu0
    %v986 = vadd.f32 %v912, %v985
    %v987 = vpop.f32.mrb[0].mxu0
    %988 = vdwg.mxu0
    %989 = vmatprep.subr.mxu0 0.0
    %v990 = vand.u32 %v687, 4294901760
    %v991 = vsub.f32 %v687, %v990
    %v992 = vand.u32 %v991, 4294901760
    %993 = vmatpush1.msra.mxu0 %v992
    %994 = vmatprep.subr.mxu0 0.0
    %995 = vmatpush1.msra.mxu0 0.0
    %996 = vmatprep.subr.mxu0 0.0
    %997 = vmatpush1.msra.mxu0 0.0
    %998 = vmatprep.subr.mxu0 0.0
    %999 = vmatpush1.msra.mxu0 0.0
    %1000 = vmatprep.subr.mxu0 0.0
    %1001 = vmatpush1.msra.mxu0 0.0
    %1002 = vmatprep.subr.mxu0 0.0
    %1003 = vmatpush1.msra.mxu0 0.0
    %1004 = vmatprep.subr.mxu0 0.0
    %1005 = vmatpush1.msra.mxu0 0.0
    %1006 = vmatprep.subr.mxu0 0.0
    %1007 = vmatpush1.msra.mxu0 0.0
    %1008 = vmatprep.subr.mxu0 0.0
    %1009 = vmatpush1.msra.mxu0 0.0
    %1010 = vmatprep.subr.mxu0 0.0
    %1011 = vmatpush1.msra.mxu0 0.0
    %1012 = vmatprep.subr.mxu0 0.0
    %1013 = vmatpush1.msra.mxu0 0.0
    %1014 = vmatprep.subr.mxu0 0.0
    %1015 = vmatpush1.msra.mxu0 0.0
    %1016 = vmatprep.subr.mxu0 0.0
    %1017 = vmatpush1.msra.mxu0 0.0
    %1018 = vmatprep.subr.mxu0 0.0
    %1019 = vmatpush1.msra.mxu0 0.0
    %1020 = vmatprep.subr.mxu0 0.0
    %1021 = vmatpush1.msra.mxu0 0.0
    %1022 = vmatprep.subr.mxu0 0.0
    %1023 = vmatpush1.msra.mxu0 0.0
    %1024 = vmatprep.subr.mxu0 0.0
    %1025 = vmatpush1.msra.mxu0 0.0
    %1026 = vmatprep.subr.mxu0 0.0
    %1027 = vmatpush1.msra.mxu0 0.0
    %1028 = vmatprep.subr.mxu0 0.0
    %1029 = vmatpush1.msra.mxu0 0.0
    %1030 = vmatprep.subr.mxu0 0.0
    %1031 = vmatpush1.msra.mxu0 0.0
    %1032 = vmatprep.subr.mxu0 0.0
    %1033 = vmatpush1.msra.mxu0 0.0
    %1034 = vmatprep.subr.mxu0 0.0
    %1035 = vmatpush1.msra.mxu0 0.0
    %1036 = vmatprep.subr.mxu0 0.0
    %1037 = vmatpush1.msra.mxu0 0.0
    %1038 = vmatprep.subr.mxu0 0.0
    %1039 = vmatpush1.msra.mxu0 0.0
    %1040 = vmatprep.subr.mxu0 0.0
    %1041 = vmatpush1.msra.mxu0 0.0
    %1042 = vmatprep.subr.mxu0 0.0
    %1043 = vmatpush1.msra.mxu0 0.0
    %1044 = vmatprep.subr.mxu0 0.0
    %1045 = vmatpush1.msra.mxu0 0.0
    %1046 = vmatprep.subr.mxu0 0.0
    %1047 = vmatpush1.msra.mxu0 0.0
    %1048 = vmatprep.subr.mxu0 0.0
    %1049 = vmatpush1.msra.mxu0 0.0
    %1050 = vmatprep.subr.mxu0 0.0
    %1051 = vmatpush1.msra.mxu0 0.0
    %1052 = vmatprep.subr.mxu0 0.0
    %1053 = vmatpush1.msra.mxu0 0.0
    %1054 = vmatprep.subr.mxu0 0.0
    %1055 = vmatpush1.msra.mxu0 0.0
    %1056 = vmatprep.mubr.f32.mxu0 0.0
    %v1057 = vand.u32 %v683, 4294901760
    %1058 = vmatmul.mubr.f32.gmra.mrb[0].mxu0 %v1057
    %v1059 = vpop.f32.mrb[0].mxu0
    %v1060 = vadd.f32 %v986, %v1059
    %v1061 = vpop.f32.mrb[0].mxu0
    %1062 = vdwg.mxu0
    %1063 = vmatprep.subr.mxu0 0.0
    %v1064 = vand.u32 %v687, 4294901760
    %1065 = vmatpush1.msra.mxu0 %v1064
    %1066 = vmatprep.subr.mxu0 0.0
    %1067 = vmatpush1.msra.mxu0 0.0
    %1068 = vmatprep.subr.mxu0 0.0
    %1069 = vmatpush1.msra.mxu0 0.0
    %1070 = vmatprep.subr.mxu0 0.0
    %1071 = vmatpush1.msra.mxu0 0.0
    %1072 = vmatprep.subr.mxu0 0.0
    %1073 = vmatpush1.msra.mxu0 0.0
    %1074 = vmatprep.subr.mxu0 0.0
    %1075 = vmatpush1.msra.mxu0 0.0
    %1076 = vmatprep.subr.mxu0 0.0
    %1077 = vmatpush1.msra.mxu0 0.0
    %1078 = vmatprep.subr.mxu0 0.0
    %1079 = vmatpush1.msra.mxu0 0.0
    %1080 = vmatprep.subr.mxu0 0.0
    %1081 = vmatpush1.msra.mxu0 0.0
    %1082 = vmatprep.subr.mxu0 0.0
    %1083 = vmatpush1.msra.mxu0 0.0
    %1084 = vmatprep.subr.mxu0 0.0
    %1085 = vmatpush1.msra.mxu0 0.0
    %1086 = vmatprep.subr.mxu0 0.0
    %1087 = vmatpush1.msra.mxu0 0.0
    %1088 = vmatprep.subr.mxu0 0.0
    %1089 = vmatpush1.msra.mxu0 0.0
    %1090 = vmatprep.subr.mxu0 0.0
    %1091 = vmatpush1.msra.mxu0 0.0
    %1092 = vmatprep.subr.mxu0 0.0
    %1093 = vmatpush1.msra.mxu0 0.0
    %1094 = vmatprep.subr.mxu0 0.0
    %1095 = vmatpush1.msra.mxu0 0.0
    %1096 = vmatprep.subr.mxu0 0.0
    %1097 = vmatpush1.msra.mxu0 0.0
    %1098 = vmatprep.subr.mxu0 0.0
    %1099 = vmatpush1.msra.mxu0 0.0
    %1100 = vmatprep.subr.mxu0 0.0
    %1101 = vmatpush1.msra.mxu0 0.0
    %1102 = vmatprep.subr.mxu0 0.0
    %1103 = vmatpush1.msra.mxu0 0.0
    %1104 = vmatprep.subr.mxu0 0.0
    %1105 = vmatpush1.msra.mxu0 0.0
    %1106 = vmatprep.subr.mxu0 0.0
    %1107 = vmatpush1.msra.mxu0 0.0
    %1108 = vmatprep.subr.mxu0 0.0
    %1109 = vmatpush1.msra.mxu0 0.0
    %1110 = vmatprep.subr.mxu0 0.0
    %1111 = vmatpush1.msra.mxu0 0.0
    %1112 = vmatprep.subr.mxu0 0.0
    %1113 = vmatpush1.msra.mxu0 0.0
    %1114 = vmatprep.subr.mxu0 0.0
    %1115 = vmatpush1.msra.mxu0 0.0
    %1116 = vmatprep.subr.mxu0 0.0
    %1117 = vmatpush1.msra.mxu0 0.0
    %1118 = vmatprep.subr.mxu0 0.0
    %1119 = vmatpush1.msra.mxu0 0.0
    %1120 = vmatprep.subr.mxu0 0.0
    %1121 = vmatpush1.msra.mxu0 0.0
    %1122 = vmatprep.subr.mxu0 0.0
    %1123 = vmatpush1.msra.mxu0 0.0
    %1124 = vmatprep.subr.mxu0 0.0
    %1125 = vmatpush1.msra.mxu0 0.0
    %1126 = vmatprep.subr.mxu0 0.0
    %1127 = vmatpush1.msra.mxu0 0.0
    %1128 = vmatprep.mubr.f32.mxu0 0.0
    %v1129 = vand.u32 %v683, 4294901760
    %1130 = vmatmul.mubr.f32.gmra.mrb[0].mxu0 %v1129
    %v1131 = vpop.f32.mrb[0].mxu0
    %v1132 = vadd.f32 %v1060, %v1131
    %v1133 = vpop.f32.mrb[0].mxu0
    %1134 = vdwg.mxu0
    %v1135 = vsub.f32 %v21, %v1132
    %v1136 = vmul.f32 %v1135, %v1135
    %1137 = vmatprep.subr.mxu0 0.0
    %v1138 = vand.u32 %v22, 4294901760
    %1139 = vmatpush1.msra.mxu0 %v1138
    %1140 = vmatprep.subr.mxu0 0.0
    %v1141 = vand.u32 %v23, 4294901760
    %1142 = vmatpush1.msra.mxu0 %v1141
    %1143 = vmatprep.subr.mxu0 0.0
    %v1144 = vand.u32 %v24, 4294901760
    %1145 = vmatpush1.msra.mxu0 %v1144
    %1146 = vmatprep.subr.mxu0 0.0
    %v1147 = vand.u32 %v25, 4294901760
    %1148 = vmatpush1.msra.mxu0 %v1147
    %1149 = vmatprep.subr.mxu0 0.0
    %v1150 = vand.u32 %v26, 4294901760
    %1151 = vmatpush1.msra.mxu0 %v1150
    %1152 = vmatprep.subr.mxu0 0.0
    %v1153 = vand.u32 %v27, 4294901760
    %1154 = vmatpush1.msra.mxu0 %v1153
    %1155 = vmatprep.subr.mxu0 0.0
    %v1156 = vand.u32 %v28, 4294901760
    %1157 = vmatpush1.msra.mxu0 %v1156
    %1158 = vmatprep.subr.mxu0 0.0
    %v1159 = vand.u32 %v29, 4294901760
    %1160 = vmatpush1.msra.mxu0 %v1159
    %1161 = vmatprep.subr.mxu0 0.0
    %v1162 = vand.u32 %v30, 4294901760
    %1163 = vmatpush1.msra.mxu0 %v1162
    %1164 = vmatprep.subr.mxu0 0.0
    %v1165 = vand.u32 %v31, 4294901760
    %1166 = vmatpush1.msra.mxu0 %v1165
    %1167 = vmatprep.subr.mxu0 0.0
    %v1168 = vand.u32 %v32, 4294901760
    %1169 = vmatpush1.msra.mxu0 %v1168
    %1170 = vmatprep.subr.mxu0 0.0
    %v1171 = vand.u32 %v33, 4294901760
    %1172 = vmatpush1.msra.mxu0 %v1171
    %1173 = vmatprep.subr.mxu0 0.0
    %v1174 = vand.u32 %v34, 4294901760
    %1175 = vmatpush1.msra.mxu0 %v1174
    %1176 = vmatprep.subr.mxu0 0.0
    %v1177 = vand.u32 %v35, 4294901760
    %1178 = vmatpush1.msra.mxu0 %v1177
    %1179 = vmatprep.subr.mxu0 0.0
    %v1180 = vand.u32 %v36, 4294901760
    %1181 = vmatpush1.msra.mxu0 %v1180
    %1182 = vmatprep.subr.mxu0 0.0
    %v1183 = vand.u32 %v37, 4294901760
    %1184 = vmatpush1.msra.mxu0 %v1183
    %1185 = vmatprep.subr.mxu0 0.0
    %1186 = vmatpush1.msra.mxu0 0.0
    %1187 = vmatprep.subr.mxu0 0.0
    %1188 = vmatpush1.msra.mxu0 0.0
    %1189 = vmatprep.subr.mxu0 0.0
    %1190 = vmatpush1.msra.mxu0 0.0
    %1191 = vmatprep.subr.mxu0 0.0
    %1192 = vmatpush1.msra.mxu0 0.0
    %1193 = vmatprep.subr.mxu0 0.0
    %1194 = vmatpush1.msra.mxu0 0.0
    %1195 = vmatprep.subr.mxu0 0.0
    %1196 = vmatpush1.msra.mxu0 0.0
    %1197 = vmatprep.subr.mxu0 0.0
    %1198 = vmatpush1.msra.mxu0 0.0
    %1199 = vmatprep.subr.mxu0 0.0
    %1200 = vmatpush1.msra.mxu0 0.0
    %1201 = vmatprep.subr.mxu0 0.0
    %1202 = vmatpush1.msra.mxu0 0.0
    %1203 = vmatprep.subr.mxu0 0.0
    %1204 = vmatpush1.msra.mxu0 0.0
    %1205 = vmatprep.subr.mxu0 0.0
    %1206 = vmatpush1.msra.mxu0 0.0
    %1207 = vmatprep.subr.mxu0 0.0
    %1208 = vmatpush1.msra.mxu0 0.0
    %1209 = vmatprep.subr.mxu0 0.0
    %1210 = vmatpush1.msra.mxu0 0.0
    %1211 = vmatprep.subr.mxu0 0.0
    %1212 = vmatpush1.msra.mxu0 0.0
    %1213 = vmatprep.subr.mxu0 0.0
    %1214 = vmatpush1.msra.mxu0 0.0
    %1215 = vmatprep.subr.mxu0 0.0
    %1216 = vmatpush1.msra.mxu0 0.0
    %1217 = vmatprep.mubr.f32.mxu0 0.0
    %v1218 = vand.u32 %v1136, 4294901760
    %v1219 = vsub.f32 %v1136, %v1218
    %v1220 = vand.u32 %v1219, 4294901760
    %v1221 = vsub.f32 %v1219, %v1220
    %v1222 = vand.u32 %v1221, 4294901760
    %1223 = vmatmul.mubr.f32.gmra.mrb[0].mxu0 %v1222
    %v1224 = vpop.f32.mrb[0].mxu0
    %v1225 = vadd.f32 0.0, %v1224
    %v1226 = vpop.f32.mrb[0].mxu0
    %1227 = vdwg.mxu0
    %1228 = vmatprep.subr.mxu0 0.0
    %v1229 = vand.u32 %v22, 4294901760
    %v1230 = vsub.f32 %v22, %v1229
    %v1231 = vand.u32 %v1230, 4294901760
    %v1232 = vsub.f32 %v1230, %v1231
    %v1233 = vand.u32 %v1232, 4294901760
    %1234 = vmatpush1.msra.mxu0 %v1233
    %1235 = vmatprep.subr.mxu0 0.0
    %v1236 = vand.u32 %v23, 4294901760
    %v1237 = vsub.f32 %v23, %v1236
    %v1238 = vand.u32 %v1237, 4294901760
    %v1239 = vsub.f32 %v1237, %v1238
    %v1240 = vand.u32 %v1239, 4294901760
    %1241 = vmatpush1.msra.mxu0 %v1240
    %1242 = vmatprep.subr.mxu0 0.0
    %v1243 = vand.u32 %v24, 4294901760
    %v1244 = vsub.f32 %v24, %v1243
    %v1245 = vand.u32 %v1244, 4294901760
    %v1246 = vsub.f32 %v1244, %v1245
    %v1247 = vand.u32 %v1246, 4294901760
    %1248 = vmatpush1.msra.mxu0 %v1247
    %1249 = vmatprep.subr.mxu0 0.0
    %v1250 = vand.u32 %v25, 4294901760
    %v1251 = vsub.f32 %v25, %v1250
    %v1252 = vand.u32 %v1251, 4294901760
    %v1253 = vsub.f32 %v1251, %v1252
    %v1254 = vand.u32 %v1253, 4294901760
    %1255 = vmatpush1.msra.mxu0 %v1254
    %1256 = vmatprep.subr.mxu0 0.0
    %v1257 = vand.u32 %v26, 4294901760
    %v1258 = vsub.f32 %v26, %v1257
    %v1259 = vand.u32 %v1258, 4294901760
    %v1260 = vsub.f32 %v1258, %v1259
    %v1261 = vand.u32 %v1260, 4294901760
    %1262 = vmatpush1.msra.mxu0 %v1261
    %1263 = vmatprep.subr.mxu0 0.0
    %v1264 = vand.u32 %v27, 4294901760
    %v1265 = vsub.f32 %v27, %v1264
    %v1266 = vand.u32 %v1265, 4294901760
    %v1267 = vsub.f32 %v1265, %v1266
    %v1268 = vand.u32 %v1267, 4294901760
    %1269 = vmatpush1.msra.mxu0 %v1268
    %1270 = vmatprep.subr.mxu0 0.0
    %v1271 = vand.u32 %v28, 4294901760
    %v1272 = vsub.f32 %v28, %v1271
    %v1273 = vand.u32 %v1272, 4294901760
    %v1274 = vsub.f32 %v1272, %v1273
    %v1275 = vand.u32 %v1274, 4294901760
    %1276 = vmatpush1.msra.mxu0 %v1275
    %1277 = vmatprep.subr.mxu0 0.0
    %v1278 = vand.u32 %v29, 4294901760
    %v1279 = vsub.f32 %v29, %v1278
    %v1280 = vand.u32 %v1279, 4294901760
    %v1281 = vsub.f32 %v1279, %v1280
    %v1282 = vand.u32 %v1281, 4294901760
    %1283 = vmatpush1.msra.mxu0 %v1282
    %1284 = vmatprep.subr.mxu0 0.0
    %v1285 = vand.u32 %v30, 4294901760
    %v1286 = vsub.f32 %v30, %v1285
    %v1287 = vand.u32 %v1286, 4294901760
    %v1288 = vsub.f32 %v1286, %v1287
    %v1289 = vand.u32 %v1288, 4294901760
    %1290 = vmatpush1.msra.mxu0 %v1289
    %1291 = vmatprep.subr.mxu0 0.0
    %v1292 = vand.u32 %v31, 4294901760
    %v1293 = vsub.f32 %v31, %v1292
    %v1294 = vand.u32 %v1293, 4294901760
    %v1295 = vsub.f32 %v1293, %v1294
    %v1296 = vand.u32 %v1295, 4294901760
    %1297 = vmatpush1.msra.mxu0 %v1296
    %1298 = vmatprep.subr.mxu0 0.0
    %v1299 = vand.u32 %v32, 4294901760
    %v1300 = vsub.f32 %v32, %v1299
    %v1301 = vand.u32 %v1300, 4294901760
    %v1302 = vsub.f32 %v1300, %v1301
    %v1303 = vand.u32 %v1302, 4294901760
    %1304 = vmatpush1.msra.mxu0 %v1303
    %1305 = vmatprep.subr.mxu0 0.0
    %v1306 = vand.u32 %v33, 4294901760
    %v1307 = vsub.f32 %v33, %v1306
    %v1308 = vand.u32 %v1307, 4294901760
    %v1309 = vsub.f32 %v1307, %v1308
    %v1310 = vand.u32 %v1309, 4294901760
    %1311 = vmatpush1.msra.mxu0 %v1310
    %1312 = vmatprep.subr.mxu0 0.0
    %v1313 = vand.u32 %v34, 4294901760
    %v1314 = vsub.f32 %v34, %v1313
    %v1315 = vand.u32 %v1314, 4294901760
    %v1316 = vsub.f32 %v1314, %v1315
    %v1317 = vand.u32 %v1316, 4294901760
    %1318 = vmatpush1.msra.mxu0 %v1317
    %1319 = vmatprep.subr.mxu0 0.0
    %v1320 = vand.u32 %v35, 4294901760
    %v1321 = vsub.f32 %v35, %v1320
    %v1322 = vand.u32 %v1321, 4294901760
    %v1323 = vsub.f32 %v1321, %v1322
    %v1324 = vand.u32 %v1323, 4294901760
    %1325 = vmatpush1.msra.mxu0 %v1324
    %1326 = vmatprep.subr.mxu0 0.0
    %v1327 = vand.u32 %v36, 4294901760
    %v1328 = vsub.f32 %v36, %v1327
    %v1329 = vand.u32 %v1328, 4294901760
    %v1330 = vsub.f32 %v1328, %v1329
    %v1331 = vand.u32 %v1330, 4294901760
    %1332 = vmatpush1.msra.mxu0 %v1331
    %1333 = vmatprep.subr.mxu0 0.0
    %v1334 = vand.u32 %v37, 4294901760
    %v1335 = vsub.f32 %v37, %v1334
    %v1336 = vand.u32 %v1335, 4294901760
    %v1337 = vsub.f32 %v1335, %v1336
    %v1338 = vand.u32 %v1337, 4294901760
    %1339 = vmatpush1.msra.mxu0 %v1338
    %1340 = vmatprep.subr.mxu0 0.0
    %1341 = vmatpush1.msra.mxu0 0.0
    %1342 = vmatprep.subr.mxu0 0.0
    %1343 = vmatpush1.msra.mxu0 0.0
    %1344 = vmatprep.subr.mxu0 0.0
    %1345 = vmatpush1.msra.mxu0 0.0
    %1346 = vmatprep.subr.mxu0 0.0
    %1347 = vmatpush1.msra.mxu0 0.0
    %1348 = vmatprep.subr.mxu0 0.0
    %1349 = vmatpush1.msra.mxu0 0.0
    %1350 = vmatprep.subr.mxu0 0.0
    %1351 = vmatpush1.msra.mxu0 0.0
    %1352 = vmatprep.subr.mxu0 0.0
    %1353 = vmatpush1.msra.mxu0 0.0
    %1354 = vmatprep.subr.mxu0 0.0
    %1355 = vmatpush1.msra.mxu0 0.0
    %1356 = vmatprep.subr.mxu0 0.0
    %1357 = vmatpush1.msra.mxu0 0.0
    %1358 = vmatprep.subr.mxu0 0.0
    %1359 = vmatpush1.msra.mxu0 0.0
    %1360 = vmatprep.subr.mxu0 0.0
    %1361 = vmatpush1.msra.mxu0 0.0
    %1362 = vmatprep.subr.mxu0 0.0
    %1363 = vmatpush1.msra.mxu0 0.0
    %1364 = vmatprep.subr.mxu0 0.0
    %1365 = vmatpush1.msra.mxu0 0.0
    %1366 = vmatprep.subr.mxu0 0.0
    %1367 = vmatpush1.msra.mxu0 0.0
    %1368 = vmatprep.subr.mxu0 0.0
    %1369 = vmatpush1.msra.mxu0 0.0
    %1370 = vmatprep.subr.mxu0 0.0
    %1371 = vmatpush1.msra.mxu0 0.0
    %1372 = vmatprep.mubr.f32.mxu0 0.0
    %v1373 = vand.u32 %v1136, 4294901760
    %1374 = vmatmul.mubr.f32.gmra.mrb[0].mxu0 %v1373
    %v1375 = vpop.f32.mrb[0].mxu0
    %v1376 = vadd.f32 %v1225, %v1375
    %v1377 = vpop.f32.mrb[0].mxu0
    %1378 = vdwg.mxu0
    %1379 = vmatprep.subr.mxu0 0.0
    %v1380 = vand.u32 %v22, 4294901760
    %v1381 = vsub.f32 %v22, %v1380
    %1382 = vmatpush1.msra.mxu0 %v1381
    %1383 = vmatprep.subr.mxu0 0.0
    %v1384 = vand.u32 %v23, 4294901760
    %v1385 = vsub.f32 %v23, %v1384
    %1386 = vmatpush1.msra.mxu0 %v1385
    %1387 = vmatprep.subr.mxu0 0.0
    %v1388 = vand.u32 %v24, 4294901760
    %v1389 = vsub.f32 %v24, %v1388
    %1390 = vmatpush1.msra.mxu0 %v1389
    %1391 = vmatprep.subr.mxu0 0.0
    %v1392 = vand.u32 %v25, 4294901760
    %v1393 = vsub.f32 %v25, %v1392
    %1394 = vmatpush1.msra.mxu0 %v1393
    %1395 = vmatprep.subr.mxu0 0.0
    %v1396 = vand.u32 %v26, 4294901760
    %v1397 = vsub.f32 %v26, %v1396
    %1398 = vmatpush1.msra.mxu0 %v1397
    %1399 = vmatprep.subr.mxu0 0.0
    %v1400 = vand.u32 %v27, 4294901760
    %v1401 = vsub.f32 %v27, %v1400
    %1402 = vmatpush1.msra.mxu0 %v1401
    %1403 = vmatprep.subr.mxu0 0.0
    %v1404 = vand.u32 %v28, 4294901760
    %v1405 = vsub.f32 %v28, %v1404
    %1406 = vmatpush1.msra.mxu0 %v1405
    %1407 = vmatprep.subr.mxu0 0.0
    %v1408 = vand.u32 %v29, 4294901760
    %v1409 = vsub.f32 %v29, %v1408
    %1410 = vmatpush1.msra.mxu0 %v1409
    %1411 = vmatprep.subr.mxu0 0.0
    %v1412 = vand.u32 %v30, 4294901760
    %v1413 = vsub.f32 %v30, %v1412
    %1414 = vmatpush1.msra.mxu0 %v1413
    %1415 = vmatprep.subr.mxu0 0.0
    %v1416 = vand.u32 %v31, 4294901760
    %v1417 = vsub.f32 %v31, %v1416
    %1418 = vmatpush1.msra.mxu0 %v1417
    %1419 = vmatprep.subr.mxu0 0.0
    %v1420 = vand.u32 %v32, 4294901760
    %v1421 = vsub.f32 %v32, %v1420
    %1422 = vmatpush1.msra.mxu0 %v1421
    %1423 = vmatprep.subr.mxu0 0.0
    %v1424 = vand.u32 %v33, 4294901760
    %v1425 = vsub.f32 %v33, %v1424
    %1426 = vmatpush1.msra.mxu0 %v1425
    %1427 = vmatprep.subr.mxu0 0.0
    %v1428 = vand.u32 %v34, 4294901760
    %v1429 = vsub.f32 %v34, %v1428
    %1430 = vmatpush1.msra.mxu0 %v1429
    %1431 = vmatprep.subr.mxu0 0.0
    %v1432 = vand.u32 %v35, 4294901760
    %v1433 = vsub.f32 %v35, %v1432
    %1434 = vmatpush1.msra.mxu0 %v1433
    %1435 = vmatprep.subr.mxu0 0.0
    %v1436 = vand.u32 %v36, 4294901760
    %v1437 = vsub.f32 %v36, %v1436
    %1438 = vmatpush1.msra.mxu0 %v1437
    %1439 = vmatprep.subr.mxu0 0.0
    %v1440 = vand.u32 %v37, 4294901760
    %v1441 = vsub.f32 %v37, %v1440
    %1442 = vmatpush1.msra.mxu0 %v1441
    %1443 = vmatprep.subr.mxu0 0.0
    %1444 = vmatpush1.msra.mxu0 0.0
    %1445 = vmatprep.subr.mxu0 0.0
    %1446 = vmatpush1.msra.mxu0 0.0
    %1447 = vmatprep.subr.mxu0 0.0
    %1448 = vmatpush1.msra.mxu0 0.0
    %1449 = vmatprep.subr.mxu0 0.0
    %1450 = vmatpush1.msra.mxu0 0.0
    %1451 = vmatprep.subr.mxu0 0.0
    %1452 = vmatpush1.msra.mxu0 0.0
    %1453 = vmatprep.subr.mxu0 0.0
    %1454 = vmatpush1.msra.mxu0 0.0
    %1455 = vmatprep.subr.mxu0 0.0
    %1456 = vmatpush1.msra.mxu0 0.0
    %1457 = vmatprep.subr.mxu0 0.0
    %1458 = vmatpush1.msra.mxu0 0.0
    %1459 = vmatprep.subr.mxu0 0.0
    %1460 = vmatpush1.msra.mxu0 0.0
    %1461 = vmatprep.subr.mxu0 0.0
    %1462 = vmatpush1.msra.mxu0 0.0
    %1463 = vmatprep.subr.mxu0 0.0
    %1464 = vmatpush1.msra.mxu0 0.0
    %1465 = vmatprep.subr.mxu0 0.0
    %1466 = vmatpush1.msra.mxu0 0.0
    %1467 = vmatprep.subr.mxu0 0.0
    %1468 = vmatpush1.msra.mxu0 0.0
    %1469 = vmatprep.subr.mxu0 0.0
    %1470 = vmatpush1.msra.mxu0 0.0
    %1471 = vmatprep.subr.mxu0 0.0
    %1472 = vmatpush1.msra.mxu0 0.0
    %1473 = vmatprep.subr.mxu0 0.0
    %1474 = vmatpush1.msra.mxu0 0.0
    %1475 = vmatprep.mubr.f32.mxu0 0.0
    %v1476 = vand.u32 %v1136, 4294901760
    %v1477 = vsub.f32 %v1136, %v1476
    %1478 = vmatmul.mubr.f32.gmra.mrb[0].mxu0 %v1477
    %v1479 = vpop.f32.mrb[0].mxu0
    %v1480 = vadd.f32 %v1376, %v1479
    %v1481 = vpop.f32.mrb[0].mxu0
    %1482 = vdwg.mxu0
    %1483 = vmatprep.subr.mxu0 0.0
    %v1484 = vand.u32 %v22, 4294901760
    %1485 = vmatpush1.msra.mxu0 %v1484
    %1486 = vmatprep.subr.mxu0 0.0
    %v1487 = vand.u32 %v23, 4294901760
    %1488 = vmatpush1.msra.mxu0 %v1487
    %1489 = vmatprep.subr.mxu0 0.0
    %v1490 = vand.u32 %v24, 4294901760
    %1491 = vmatpush1.msra.mxu0 %v1490
    %1492 = vmatprep.subr.mxu0 0.0
    %v1493 = vand.u32 %v25, 4294901760
    %1494 = vmatpush1.msra.mxu0 %v1493
    %1495 = vmatprep.subr.mxu0 0.0
    %v1496 = vand.u32 %v26, 4294901760
    %1497 = vmatpush1.msra.mxu0 %v1496
    %1498 = vmatprep.subr.mxu0 0.0
    %v1499 = vand.u32 %v27, 4294901760
    %1500 = vmatpush1.msra.mxu0 %v1499
    %1501 = vmatprep.subr.mxu0 0.0
    %v1502 = vand.u32 %v28, 4294901760
    %1503 = vmatpush1.msra.mxu0 %v1502
    %1504 = vmatprep.subr.mxu0 0.0
    %v1505 = vand.u32 %v29, 4294901760
    %1506 = vmatpush1.msra.mxu0 %v1505
    %1507 = vmatprep.subr.mxu0 0.0
    %v1508 = vand.u32 %v30, 4294901760
    %1509 = vmatpush1.msra.mxu0 %v1508
    %1510 = vmatprep.subr.mxu0 0.0
    %v1511 = vand.u32 %v31, 4294901760
    %1512 = vmatpush1.msra.mxu0 %v1511
    %1513 = vmatprep.subr.mxu0 0.0
    %v1514 = vand.u32 %v32, 4294901760
    %1515 = vmatpush1.msra.mxu0 %v1514
    %1516 = vmatprep.subr.mxu0 0.0
    %v1517 = vand.u32 %v33, 4294901760
    %1518 = vmatpush1.msra.mxu0 %v1517
    %1519 = vmatprep.subr.mxu0 0.0
    %v1520 = vand.u32 %v34, 4294901760
    %1521 = vmatpush1.msra.mxu0 %v1520
    %1522 = vmatprep.subr.mxu0 0.0
    %v1523 = vand.u32 %v35, 4294901760
    %1524 = vmatpush1.msra.mxu0 %v1523
    %1525 = vmatprep.subr.mxu0 0.0
    %v1526 = vand.u32 %v36, 4294901760
    %1527 = vmatpush1.msra.mxu0 %v1526
    %1528 = vmatprep.subr.mxu0 0.0
    %v1529 = vand.u32 %v37, 4294901760
    %1530 = vmatpush1.msra.mxu0 %v1529
    %1531 = vmatprep.subr.mxu0 0.0
    %1532 = vmatpush1.msra.mxu0 0.0
    %1533 = vmatprep.subr.mxu0 0.0
    %1534 = vmatpush1.msra.mxu0 0.0
    %1535 = vmatprep.subr.mxu0 0.0
    %1536 = vmatpush1.msra.mxu0 0.0
    %1537 = vmatprep.subr.mxu0 0.0
    %1538 = vmatpush1.msra.mxu0 0.0
    %1539 = vmatprep.subr.mxu0 0.0
    %1540 = vmatpush1.msra.mxu0 0.0
    %1541 = vmatprep.subr.mxu0 0.0
    %1542 = vmatpush1.msra.mxu0 0.0
    %1543 = vmatprep.subr.mxu0 0.0
    %1544 = vmatpush1.msra.mxu0 0.0
    %1545 = vmatprep.subr.mxu0 0.0
    %1546 = vmatpush1.msra.mxu0 0.0
    %1547 = vmatprep.subr.mxu0 0.0
    %1548 = vmatpush1.msra.mxu0 0.0
    %1549 = vmatprep.subr.mxu0 0.0
    %1550 = vmatpush1.msra.mxu0 0.0
    %1551 = vmatprep.subr.mxu0 0.0
    %1552 = vmatpush1.msra.mxu0 0.0
    %1553 = vmatprep.subr.mxu0 0.0
    %1554 = vmatpush1.msra.mxu0 0.0
    %1555 = vmatprep.subr.mxu0 0.0
    %1556 = vmatpush1.msra.mxu0 0.0
    %1557 = vmatprep.subr.mxu0 0.0
    %1558 = vmatpush1.msra.mxu0 0.0
    %1559 = vmatprep.subr.mxu0 0.0
    %1560 = vmatpush1.msra.mxu0 0.0
    %1561 = vmatprep.subr.mxu0 0.0
    %1562 = vmatpush1.msra.mxu0 0.0
    %1563 = vmatprep.mubr.f32.mxu0 0.0
    %v1564 = vand.u32 %v1136, 4294901760
    %v1565 = vsub.f32 %v1136, %v1564
    %v1566 = vand.u32 %v1565, 4294901760
    %1567 = vmatmul.mubr.f32.gmra.mrb[0].mxu0 %v1566
    %v1568 = vpop.f32.mrb[0].mxu0
    %v1569 = vadd.f32 %v1480, %v1568
    %v1570 = vpop.f32.mrb[0].mxu0
    %1571 = vdwg.mxu0
    %1572 = vmatprep.subr.mxu0 0.0
    %v1573 = vand.u32 %v22, 4294901760
    %v1574 = vsub.f32 %v22, %v1573
    %v1575 = vand.u32 %v1574, 4294901760
    %1576 = vmatpush1.msra.mxu0 %v1575
    %1577 = vmatprep.subr.mxu0 0.0
    %v1578 = vand.u32 %v23, 4294901760
    %v1579 = vsub.f32 %v23, %v1578
    %v1580 = vand.u32 %v1579, 4294901760
    %1581 = vmatpush1.msra.mxu0 %v1580
    %1582 = vmatprep.subr.mxu0 0.0
    %v1583 = vand.u32 %v24, 4294901760
    %v1584 = vsub.f32 %v24, %v1583
    %v1585 = vand.u32 %v1584, 4294901760
    %1586 = vmatpush1.msra.mxu0 %v1585
    %1587 = vmatprep.subr.mxu0 0.0
    %v1588 = vand.u32 %v25, 4294901760
    %v1589 = vsub.f32 %v25, %v1588
    %v1590 = vand.u32 %v1589, 4294901760
    %1591 = vmatpush1.msra.mxu0 %v1590
    %1592 = vmatprep.subr.mxu0 0.0
    %v1593 = vand.u32 %v26, 4294901760
    %v1594 = vsub.f32 %v26, %v1593
    %v1595 = vand.u32 %v1594, 4294901760
    %1596 = vmatpush1.msra.mxu0 %v1595
    %1597 = vmatprep.subr.mxu0 0.0
    %v1598 = vand.u32 %v27, 4294901760
    %v1599 = vsub.f32 %v27, %v1598
    %v1600 = vand.u32 %v1599, 4294901760
    %1601 = vmatpush1.msra.mxu0 %v1600
    %1602 = vmatprep.subr.mxu0 0.0
    %v1603 = vand.u32 %v28, 4294901760
    %v1604 = vsub.f32 %v28, %v1603
    %v1605 = vand.u32 %v1604, 4294901760
    %1606 = vmatpush1.msra.mxu0 %v1605
    %1607 = vmatprep.subr.mxu0 0.0
    %v1608 = vand.u32 %v29, 4294901760
    %v1609 = vsub.f32 %v29, %v1608
    %v1610 = vand.u32 %v1609, 4294901760
    %1611 = vmatpush1.msra.mxu0 %v1610
    %1612 = vmatprep.subr.mxu0 0.0
    %v1613 = vand.u32 %v30, 4294901760
    %v1614 = vsub.f32 %v30, %v1613
    %v1615 = vand.u32 %v1614, 4294901760
    %1616 = vmatpush1.msra.mxu0 %v1615
    %1617 = vmatprep.subr.mxu0 0.0
    %v1618 = vand.u32 %v31, 4294901760
    %v1619 = vsub.f32 %v31, %v1618
    %v1620 = vand.u32 %v1619, 4294901760
    %1621 = vmatpush1.msra.mxu0 %v1620
    %1622 = vmatprep.subr.mxu0 0.0
    %v1623 = vand.u32 %v32, 4294901760
    %v1624 = vsub.f32 %v32, %v1623
    %v1625 = vand.u32 %v1624, 4294901760
    %1626 = vmatpush1.msra.mxu0 %v1625
    %1627 = vmatprep.subr.mxu0 0.0
    %v1628 = vand.u32 %v33, 4294901760
    %v1629 = vsub.f32 %v33, %v1628
    %v1630 = vand.u32 %v1629, 4294901760
    %1631 = vmatpush1.msra.mxu0 %v1630
    %1632 = vmatprep.subr.mxu0 0.0
    %v1633 = vand.u32 %v34, 4294901760
    %v1634 = vsub.f32 %v34, %v1633
    %v1635 = vand.u32 %v1634, 4294901760
    %1636 = vmatpush1.msra.mxu0 %v1635
    %1637 = vmatprep.subr.mxu0 0.0
    %v1638 = vand.u32 %v35, 4294901760
    %v1639 = vsub.f32 %v35, %v1638
    %v1640 = vand.u32 %v1639, 4294901760
    %1641 = vmatpush1.msra.mxu0 %v1640
    %1642 = vmatprep.subr.mxu0 0.0
    %v1643 = vand.u32 %v36, 4294901760
    %v1644 = vsub.f32 %v36, %v1643
    %v1645 = vand.u32 %v1644, 4294901760
    %1646 = vmatpush1.msra.mxu0 %v1645
    %1647 = vmatprep.subr.mxu0 0.0
    %v1648 = vand.u32 %v37, 4294901760
    %v1649 = vsub.f32 %v37, %v1648
    %v1650 = vand.u32 %v1649, 4294901760
    %1651 = vmatpush1.msra.mxu0 %v1650
    %1652 = vmatprep.subr.mxu0 0.0
    %1653 = vmatpush1.msra.mxu0 0.0
    %1654 = vmatprep.subr.mxu0 0.0
    %1655 = vmatpush1.msra.mxu0 0.0
    %1656 = vmatprep.subr.mxu0 0.0
    %1657 = vmatpush1.msra.mxu0 0.0
    %1658 = vmatprep.subr.mxu0 0.0
    %1659 = vmatpush1.msra.mxu0 0.0
    %1660 = vmatprep.subr.mxu0 0.0
    %1661 = vmatpush1.msra.mxu0 0.0
    %1662 = vmatprep.subr.mxu0 0.0
    %1663 = vmatpush1.msra.mxu0 0.0
    %1664 = vmatprep.subr.mxu0 0.0
    %1665 = vmatpush1.msra.mxu0 0.0
    %1666 = vmatprep.subr.mxu0 0.0
    %1667 = vmatpush1.msra.mxu0 0.0
    %1668 = vmatprep.subr.mxu0 0.0
    %1669 = vmatpush1.msra.mxu0 0.0
    %1670 = vmatprep.subr.mxu0 0.0
    %1671 = vmatpush1.msra.mxu0 0.0
    %1672 = vmatprep.subr.mxu0 0.0
    %1673 = vmatpush1.msra.mxu0 0.0
    %1674 = vmatprep.subr.mxu0 0.0
    %1675 = vmatpush1.msra.mxu0 0.0
    %1676 = vmatprep.subr.mxu0 0.0
    %1677 = vmatpush1.msra.mxu0 0.0
    %1678 = vmatprep.subr.mxu0 0.0
    %1679 = vmatpush1.msra.mxu0 0.0
    %1680 = vmatprep.subr.mxu0 0.0
    %1681 = vmatpush1.msra.mxu0 0.0
    %1682 = vmatprep.subr.mxu0 0.0
    %1683 = vmatpush1.msra.mxu0 0.0
    %1684 = vmatprep.mubr.f32.mxu0 0.0
    %v1685 = vand.u32 %v1136, 4294901760
    %1686 = vmatmul.mubr.f32.gmra.mrb[0].mxu0 %v1685
    %v1687 = vpop.f32.mrb[0].mxu0
    %v1688 = vadd.f32 %v1569, %v1687
    %v1689 = vpop.f32.mrb[0].mxu0
    %1690 = vdwg.mxu0
    %1691 = vmatprep.subr.mxu0 0.0
    %v1692 = vand.u32 %v22, 4294901760
    %1693 = vmatpush1.msra.mxu0 %v1692
    %1694 = vmatprep.subr.mxu0 0.0
    %v1695 = vand.u32 %v23, 4294901760
    %1696 = vmatpush1.msra.mxu0 %v1695
    %1697 = vmatprep.subr.mxu0 0.0
    %v1698 = vand.u32 %v24, 4294901760
    %1699 = vmatpush1.msra.mxu0 %v1698
    %1700 = vmatprep.subr.mxu0 0.0
    %v1701 = vand.u32 %v25, 4294901760
    %1702 = vmatpush1.msra.mxu0 %v1701
    %1703 = vmatprep.subr.mxu0 0.0
    %v1704 = vand.u32 %v26, 4294901760
    %1705 = vmatpush1.msra.mxu0 %v1704
    %1706 = vmatprep.subr.mxu0 0.0
    %v1707 = vand.u32 %v27, 4294901760
    %1708 = vmatpush1.msra.mxu0 %v1707
    %1709 = vmatprep.subr.mxu0 0.0
    %v1710 = vand.u32 %v28, 4294901760
    %1711 = vmatpush1.msra.mxu0 %v1710
    %1712 = vmatprep.subr.mxu0 0.0
    %v1713 = vand.u32 %v29, 4294901760
    %1714 = vmatpush1.msra.mxu0 %v1713
    %1715 = vmatprep.subr.mxu0 0.0
    %v1716 = vand.u32 %v30, 4294901760
    %1717 = vmatpush1.msra.mxu0 %v1716
    %1718 = vmatprep.subr.mxu0 0.0
    %v1719 = vand.u32 %v31, 4294901760
    %1720 = vmatpush1.msra.mxu0 %v1719
    %1721 = vmatprep.subr.mxu0 0.0
    %v1722 = vand.u32 %v32, 4294901760
    %1723 = vmatpush1.msra.mxu0 %v1722
    %1724 = vmatprep.subr.mxu0 0.0
    %v1725 = vand.u32 %v33, 4294901760
    %1726 = vmatpush1.msra.mxu0 %v1725
    %1727 = vmatprep.subr.mxu0 0.0
    %v1728 = vand.u32 %v34, 4294901760
    %1729 = vmatpush1.msra.mxu0 %v1728
    %1730 = vmatprep.subr.mxu0 0.0
    %v1731 = vand.u32 %v35, 4294901760
    %1732 = vmatpush1.msra.mxu0 %v1731
    %1733 = vmatprep.subr.mxu0 0.0
    %v1734 = vand.u32 %v36, 4294901760
    %1735 = vmatpush1.msra.mxu0 %v1734
    %1736 = vmatprep.subr.mxu0 0.0
    %v1737 = vand.u32 %v37, 4294901760
    %1738 = vmatpush1.msra.mxu0 %v1737
    %1739 = vmatprep.subr.mxu0 0.0
    %1740 = vmatpush1.msra.mxu0 0.0
    %1741 = vmatprep.subr.mxu0 0.0
    %1742 = vmatpush1.msra.mxu0 0.0
    %1743 = vmatprep.subr.mxu0 0.0
    %1744 = vmatpush1.msra.mxu0 0.0
    %1745 = vmatprep.subr.mxu0 0.0
    %1746 = vmatpush1.msra.mxu0 0.0
    %1747 = vmatprep.subr.mxu0 0.0
    %1748 = vmatpush1.msra.mxu0 0.0
    %1749 = vmatprep.subr.mxu0 0.0
    %1750 = vmatpush1.msra.mxu0 0.0
    %1751 = vmatprep.subr.mxu0 0.0
    %1752 = vmatpush1.msra.mxu0 0.0
    %1753 = vmatprep.subr.mxu0 0.0
    %1754 = vmatpush1.msra.mxu0 0.0
    %1755 = vmatprep.subr.mxu0 0.0
    %1756 = vmatpush1.msra.mxu0 0.0
    %1757 = vmatprep.subr.mxu0 0.0
    %1758 = vmatpush1.msra.mxu0 0.0
    %1759 = vmatprep.subr.mxu0 0.0
    %1760 = vmatpush1.msra.mxu0 0.0
    %1761 = vmatprep.subr.mxu0 0.0
    %1762 = vmatpush1.msra.mxu0 0.0
    %1763 = vmatprep.subr.mxu0 0.0
    %1764 = vmatpush1.msra.mxu0 0.0
    %1765 = vmatprep.subr.mxu0 0.0
    %1766 = vmatpush1.msra.mxu0 0.0
    %1767 = vmatprep.subr.mxu0 0.0
    %1768 = vmatpush1.msra.mxu0 0.0
    %1769 = vmatprep.subr.mxu0 0.0
    %1770 = vmatpush1.msra.mxu0 0.0
    %1771 = vmatprep.mubr.f32.mxu0 0.0
    %v1772 = vand.u32 %v1136, 4294901760
    %1773 = vmatmul.mubr.f32.gmra.mrb[0].mxu0 %v1772
    %v1774 = vpop.f32.mrb[0].mxu0
    %v1775 = vadd.f32 %v1688, %v1774
    %v1776 = vpop.f32.mrb[0].mxu0
    %1777 = vdwg.mxu0
    %v1778 = vmul.f32 %v1775, 0.032258064
    %v1779 = vrsqrt.pop %v1778
    %v1780 = vmul.f32 %v1778, %v1779
    %vm1781 = vcmp.eq.f32.partialorder %v1778, inf
    %v1782 = vsel %vm1781, %v1778, %v1780
    %vm1783 = vcmp.eq.f32.partialorder %v1778, 0.0
    %v1784 = vand.u32 %v1778, 2147483648
    %v1785 = vsel %vm1783, %v1784, %v1782
    %v1786 = vadd.f32 %v1785, 1e-06
    %v1787 = vrcp.pop %v1786
    %v1788 = vmul.f32 1.0, %v1787
    %v1790 = vsel %vm681, %v1788, 0
    %1792 = vmatprep.subr.mxu0 0.0
    %v1793 = vand.u32 %v687, 4294901760
    %1794 = vmatpush1.msra.mxu0 %v1793
    %1795 = vmatprep.subr.mxu0 0.0
    %1796 = vmatpush1.msra.mxu0 0.0
    %1797 = vmatprep.subr.mxu0 0.0
    %1798 = vmatpush1.msra.mxu0 0.0
    %1799 = vmatprep.subr.mxu0 0.0
    %1800 = vmatpush1.msra.mxu0 0.0
    %1801 = vmatprep.subr.mxu0 0.0
    %1802 = vmatpush1.msra.mxu0 0.0
    %1803 = vmatprep.subr.mxu0 0.0
    %1804 = vmatpush1.msra.mxu0 0.0
    %1805 = vmatprep.subr.mxu0 0.0
    %1806 = vmatpush1.msra.mxu0 0.0
    %1807 = vmatprep.subr.mxu0 0.0
    %1808 = vmatpush1.msra.mxu0 0.0
    %1809 = vmatprep.subr.mxu0 0.0
    %1810 = vmatpush1.msra.mxu0 0.0
    %1811 = vmatprep.subr.mxu0 0.0
    %1812 = vmatpush1.msra.mxu0 0.0
    %1813 = vmatprep.subr.mxu0 0.0
    %1814 = vmatpush1.msra.mxu0 0.0
    %1815 = vmatprep.subr.mxu0 0.0
    %1816 = vmatpush1.msra.mxu0 0.0
    %1817 = vmatprep.subr.mxu0 0.0
    %1818 = vmatpush1.msra.mxu0 0.0
    %1819 = vmatprep.subr.mxu0 0.0
    %1820 = vmatpush1.msra.mxu0 0.0
    %1821 = vmatprep.subr.mxu0 0.0
    %1822 = vmatpush1.msra.mxu0 0.0
    %1823 = vmatprep.subr.mxu0 0.0
    %1824 = vmatpush1.msra.mxu0 0.0
    %1825 = vmatprep.subr.mxu0 0.0
    %1826 = vmatpush1.msra.mxu0 0.0
    %1827 = vmatprep.subr.mxu0 0.0
    %1828 = vmatpush1.msra.mxu0 0.0
    %1829 = vmatprep.subr.mxu0 0.0
    %1830 = vmatpush1.msra.mxu0 0.0
    %1831 = vmatprep.subr.mxu0 0.0
    %1832 = vmatpush1.msra.mxu0 0.0
    %1833 = vmatprep.subr.mxu0 0.0
    %1834 = vmatpush1.msra.mxu0 0.0
    %1835 = vmatprep.subr.mxu0 0.0
    %1836 = vmatpush1.msra.mxu0 0.0
    %1837 = vmatprep.subr.mxu0 0.0
    %1838 = vmatpush1.msra.mxu0 0.0
    %1839 = vmatprep.subr.mxu0 0.0
    %1840 = vmatpush1.msra.mxu0 0.0
    %1841 = vmatprep.subr.mxu0 0.0
    %1842 = vmatpush1.msra.mxu0 0.0
    %1843 = vmatprep.subr.mxu0 0.0
    %1844 = vmatpush1.msra.mxu0 0.0
    %1845 = vmatprep.subr.mxu0 0.0
    %1846 = vmatpush1.msra.mxu0 0.0
    %1847 = vmatprep.subr.mxu0 0.0
    %1848 = vmatpush1.msra.mxu0 0.0
    %1849 = vmatprep.subr.mxu0 0.0
    %1850 = vmatpush1.msra.mxu0 0.0
    %1851 = vmatprep.subr.mxu0 0.0
    %1852 = vmatpush1.msra.mxu0 0.0
    %1853 = vmatprep.subr.mxu0 0.0
    %1854 = vmatpush1.msra.mxu0 0.0
    %1855 = vmatprep.subr.mxu0 0.0
    %1856 = vmatpush1.msra.mxu0 0.0
    %1857 = vmatprep.mubr.f32.mxu0 0.0
    %v1858 = vand.u32 %v1790, 4294901760
    %v1859 = vsub.f32 %v1790, %v1858
    %v1860 = vand.u32 %v1859, 4294901760
    %v1861 = vsub.f32 %v1859, %v1860
    %v1862 = vand.u32 %v1861, 4294901760
    %1863 = vmatmul.mubr.f32.gmra.mrb[0].mxu0 %v1862
    %v1864 = vpop.f32.mrb[0].mxu0
    %v1865 = vadd.f32 0.0, %v1864
    %v1866 = vpop.f32.mrb[0].mxu0
    %1867 = vdwg.mxu0
    %1868 = vmatprep.subr.mxu0 0.0
    %v1869 = vand.u32 %v687, 4294901760
    %v1870 = vsub.f32 %v687, %v1869
    %v1871 = vand.u32 %v1870, 4294901760
    %v1872 = vsub.f32 %v1870, %v1871
    %v1873 = vand.u32 %v1872, 4294901760
    %1874 = vmatpush1.msra.mxu0 %v1873
    %1875 = vmatprep.subr.mxu0 0.0
    %1876 = vmatpush1.msra.mxu0 0.0
    %1877 = vmatprep.subr.mxu0 0.0
    %1878 = vmatpush1.msra.mxu0 0.0
    %1879 = vmatprep.subr.mxu0 0.0
    %1880 = vmatpush1.msra.mxu0 0.0
    %1881 = vmatprep.subr.mxu0 0.0
    %1882 = vmatpush1.msra.mxu0 0.0
    %1883 = vmatprep.subr.mxu0 0.0
    %1884 = vmatpush1.msra.mxu0 0.0
    %1885 = vmatprep.subr.mxu0 0.0
    %1886 = vmatpush1.msra.mxu0 0.0
    %1887 = vmatprep.subr.mxu0 0.0
    %1888 = vmatpush1.msra.mxu0 0.0
    %1889 = vmatprep.subr.mxu0 0.0
    %1890 = vmatpush1.msra.mxu0 0.0
    %1891 = vmatprep.subr.mxu0 0.0
    %1892 = vmatpush1.msra.mxu0 0.0
    %1893 = vmatprep.subr.mxu0 0.0
    %1894 = vmatpush1.msra.mxu0 0.0
    %1895 = vmatprep.subr.mxu0 0.0
    %1896 = vmatpush1.msra.mxu0 0.0
    %1897 = vmatprep.subr.mxu0 0.0
    %1898 = vmatpush1.msra.mxu0 0.0
    %1899 = vmatprep.subr.mxu0 0.0
    %1900 = vmatpush1.msra.mxu0 0.0
    %1901 = vmatprep.subr.mxu0 0.0
    %1902 = vmatpush1.msra.mxu0 0.0
    %1903 = vmatprep.subr.mxu0 0.0
    %1904 = vmatpush1.msra.mxu0 0.0
    %1905 = vmatprep.subr.mxu0 0.0
    %1906 = vmatpush1.msra.mxu0 0.0
    %1907 = vmatprep.subr.mxu0 0.0
    %1908 = vmatpush1.msra.mxu0 0.0
    %1909 = vmatprep.subr.mxu0 0.0
    %1910 = vmatpush1.msra.mxu0 0.0
    %1911 = vmatprep.subr.mxu0 0.0
    %1912 = vmatpush1.msra.mxu0 0.0
    %1913 = vmatprep.subr.mxu0 0.0
    %1914 = vmatpush1.msra.mxu0 0.0
    %1915 = vmatprep.subr.mxu0 0.0
    %1916 = vmatpush1.msra.mxu0 0.0
    %1917 = vmatprep.subr.mxu0 0.0
    %1918 = vmatpush1.msra.mxu0 0.0
    %1919 = vmatprep.subr.mxu0 0.0
    %1920 = vmatpush1.msra.mxu0 0.0
    %1921 = vmatprep.subr.mxu0 0.0
    %1922 = vmatpush1.msra.mxu0 0.0
    %1923 = vmatprep.subr.mxu0 0.0
    %1924 = vmatpush1.msra.mxu0 0.0
    %1925 = vmatprep.subr.mxu0 0.0
    %1926 = vmatpush1.msra.mxu0 0.0
    %1927 = vmatprep.subr.mxu0 0.0
    %1928 = vmatpush1.msra.mxu0 0.0
    %1929 = vmatprep.subr.mxu0 0.0
    %1930 = vmatpush1.msra.mxu0 0.0
    %1931 = vmatprep.subr.mxu0 0.0
    %1932 = vmatpush1.msra.mxu0 0.0
    %1933 = vmatprep.subr.mxu0 0.0
    %1934 = vmatpush1.msra.mxu0 0.0
    %1935 = vmatprep.subr.mxu0 0.0
    %1936 = vmatpush1.msra.mxu0 0.0
    %1937 = vmatprep.mubr.f32.mxu0 0.0
    %v1938 = vand.u32 %v1790, 4294901760
    %1939 = vmatmul.mubr.f32.gmra.mrb[0].mxu0 %v1938
    %v1940 = vpop.f32.mrb[0].mxu0
    %v1941 = vadd.f32 %v1865, %v1940
    %v1942 = vpop.f32.mrb[0].mxu0
    %1943 = vdwg.mxu0
    %1944 = vmatprep.subr.mxu0 0.0
    %v1945 = vand.u32 %v687, 4294901760
    %v1946 = vsub.f32 %v687, %v1945
    %1947 = vmatpush1.msra.mxu0 %v1946
    %1948 = vmatprep.subr.mxu0 0.0
    %1949 = vmatpush1.msra.mxu0 0.0
    %1950 = vmatprep.subr.mxu0 0.0
    %1951 = vmatpush1.msra.mxu0 0.0
    %1952 = vmatprep.subr.mxu0 0.0
    %1953 = vmatpush1.msra.mxu0 0.0
    %1954 = vmatprep.subr.mxu0 0.0
    %1955 = vmatpush1.msra.mxu0 0.0
    %1956 = vmatprep.subr.mxu0 0.0
    %1957 = vmatpush1.msra.mxu0 0.0
    %1958 = vmatprep.subr.mxu0 0.0
    %1959 = vmatpush1.msra.mxu0 0.0
    %1960 = vmatprep.subr.mxu0 0.0
    %1961 = vmatpush1.msra.mxu0 0.0
    %1962 = vmatprep.subr.mxu0 0.0
    %1963 = vmatpush1.msra.mxu0 0.0
    %1964 = vmatprep.subr.mxu0 0.0
    %1965 = vmatpush1.msra.mxu0 0.0
    %1966 = vmatprep.subr.mxu0 0.0
    %1967 = vmatpush1.msra.mxu0 0.0
    %1968 = vmatprep.subr.mxu0 0.0
    %1969 = vmatpush1.msra.mxu0 0.0
    %1970 = vmatprep.subr.mxu0 0.0
    %1971 = vmatpush1.msra.mxu0 0.0
    %1972 = vmatprep.subr.mxu0 0.0
    %1973 = vmatpush1.msra.mxu0 0.0
    %1974 = vmatprep.subr.mxu0 0.0
    %1975 = vmatpush1.msra.mxu0 0.0
    %1976 = vmatprep.subr.mxu0 0.0
    %1977 = vmatpush1.msra.mxu0 0.0
    %1978 = vmatprep.subr.mxu0 0.0
    %1979 = vmatpush1.msra.mxu0 0.0
    %1980 = vmatprep.subr.mxu0 0.0
    %1981 = vmatpush1.msra.mxu0 0.0
    %1982 = vmatprep.subr.mxu0 0.0
    %1983 = vmatpush1.msra.mxu0 0.0
    %1984 = vmatprep.subr.mxu0 0.0
    %1985 = vmatpush1.msra.mxu0 0.0
    %1986 = vmatprep.subr.mxu0 0.0
    %1987 = vmatpush1.msra.mxu0 0.0
    %1988 = vmatprep.subr.mxu0 0.0
    %1989 = vmatpush1.msra.mxu0 0.0
    %1990 = vmatprep.subr.mxu0 0.0
    %1991 = vmatpush1.msra.mxu0 0.0
    %1992 = vmatprep.subr.mxu0 0.0
    %1993 = vmatpush1.msra.mxu0 0.0
    %1994 = vmatprep.subr.mxu0 0.0
    %1995 = vmatpush1.msra.mxu0 0.0
    %1996 = vmatprep.subr.mxu0 0.0
    %1997 = vmatpush1.msra.mxu0 0.0
    %1998 = vmatprep.subr.mxu0 0.0
    %1999 = vmatpush1.msra.mxu0 0.0
    %2000 = vmatprep.subr.mxu0 0.0
    %2001 = vmatpush1.msra.mxu0 0.0
    %2002 = vmatprep.subr.mxu0 0.0
    %2003 = vmatpush1.msra.mxu0 0.0
    %2004 = vmatprep.subr.mxu0 0.0
    %2005 = vmatpush1.msra.mxu0 0.0
    %2006 = vmatprep.subr.mxu0 0.0
    %2007 = vmatpush1.msra.mxu0 0.0
    %2008 = vmatprep.subr.mxu0 0.0
    %2009 = vmatpush1.msra.mxu0 0.0
    %2010 = vmatprep.mubr.f32.mxu0 0.0
    %v2011 = vand.u32 %v1790, 4294901760
    %v2012 = vsub.f32 %v1790, %v2011
    %2013 = vmatmul.mubr.f32.gmra.mrb[0].mxu0 %v2012
    %v2014 = vpop.f32.mrb[0].mxu0
    %v2015 = vadd.f32 %v1941, %v2014
    %v2016 = vpop.f32.mrb[0].mxu0
    %2017 = vdwg.mxu0
    %2018 = vmatprep.subr.mxu0 0.0
    %v2019 = vand.u32 %v687, 4294901760
    %2020 = vmatpush1.msra.mxu0 %v2019
    %2021 = vmatprep.subr.mxu0 0.0
    %2022 = vmatpush1.msra.mxu0 0.0
    %2023 = vmatprep.subr.mxu0 0.0
    %2024 = vmatpush1.msra.mxu0 0.0
    %2025 = vmatprep.subr.mxu0 0.0
    %2026 = vmatpush1.msra.mxu0 0.0
    %2027 = vmatprep.subr.mxu0 0.0
    %2028 = vmatpush1.msra.mxu0 0.0
    %2029 = vmatprep.subr.mxu0 0.0
    %2030 = vmatpush1.msra.mxu0 0.0
    %2031 = vmatprep.subr.mxu0 0.0
    %2032 = vmatpush1.msra.mxu0 0.0
    %2033 = vmatprep.subr.mxu0 0.0
    %2034 = vmatpush1.msra.mxu0 0.0
    %2035 = vmatprep.subr.mxu0 0.0
    %2036 = vmatpush1.msra.mxu0 0.0
    %2037 = vmatprep.subr.mxu0 0.0
    %2038 = vmatpush1.msra.mxu0 0.0
    %2039 = vmatprep.subr.mxu0 0.0
    %2040 = vmatpush1.msra.mxu0 0.0
    %2041 = vmatprep.subr.mxu0 0.0
    %2042 = vmatpush1.msra.mxu0 0.0
    %2043 = vmatprep.subr.mxu0 0.0
    %2044 = vmatpush1.msra.mxu0 0.0
    %2045 = vmatprep.subr.mxu0 0.0
    %2046 = vmatpush1.msra.mxu0 0.0
    %2047 = vmatprep.subr.mxu0 0.0
    %2048 = vmatpush1.msra.mxu0 0.0
    %2049 = vmatprep.subr.mxu0 0.0
    %2050 = vmatpush1.msra.mxu0 0.0
    %2051 = vmatprep.subr.mxu0 0.0
    %2052 = vmatpush1.msra.mxu0 0.0
    %2053 = vmatprep.subr.mxu0 0.0
    %2054 = vmatpush1.msra.mxu0 0.0
    %2055 = vmatprep.subr.mxu0 0.0
    %2056 = vmatpush1.msra.mxu0 0.0
    %2057 = vmatprep.subr.mxu0 0.0
    %2058 = vmatpush1.msra.mxu0 0.0
    %2059 = vmatprep.subr.mxu0 0.0
    %2060 = vmatpush1.msra.mxu0 0.0
    %2061 = vmatprep.subr.mxu0 0.0
    %2062 = vmatpush1.msra.mxu0 0.0
    %2063 = vmatprep.subr.mxu0 0.0
    %2064 = vmatpush1.msra.mxu0 0.0
    %2065 = vmatprep.subr.mxu0 0.0
    %2066 = vmatpush1.msra.mxu0 0.0
    %2067 = vmatprep.subr.mxu0 0.0
    %2068 = vmatpush1.msra.mxu0 0.0
    %2069 = vmatprep.subr.mxu0 0.0
    %2070 = vmatpush1.msra.mxu0 0.0
    %2071 = vmatprep.subr.mxu0 0.0
    %2072 = vmatpush1.msra.mxu0 0.0
    %2073 = vmatprep.subr.mxu0 0.0
    %2074 = vmatpush1.msra.mxu0 0.0
    %2075 = vmatprep.subr.mxu0 0.0
    %2076 = vmatpush1.msra.mxu0 0.0
    %2077 = vmatprep.subr.mxu0 0.0
    %2078 = vmatpush1.msra.mxu0 0.0
    %2079 = vmatprep.subr.mxu0 0.0
    %2080 = vmatpush1.msra.mxu0 0.0
    %2081 = vmatprep.subr.mxu0 0.0
    %2082 = vmatpush1.msra.mxu0 0.0
    %2083 = vmatprep.mubr.f32.mxu0 0.0
    %v2084 = vand.u32 %v1790, 4294901760
    %v2085 = vsub.f32 %v1790, %v2084
    %v2086 = vand.u32 %v2085, 4294901760
    %2087 = vmatmul.mubr.f32.gmra.mrb[0].mxu0 %v2086
    %v2088 = vpop.f32.mrb[0].mxu0
    %v2089 = vadd.f32 %v2015, %v2088
    %v2090 = vpop.f32.mrb[0].mxu0
    %2091 = vdwg.mxu0
    %2092 = vmatprep.subr.mxu0 0.0
    %v2093 = vand.u32 %v687, 4294901760
    %v2094 = vsub.f32 %v687, %v2093
    %v2095 = vand.u32 %v2094, 4294901760
    %2096 = vmatpush1.msra.mxu0 %v2095
    %2097 = vmatprep.subr.mxu0 0.0
    %2098 = vmatpush1.msra.mxu0 0.0
    %2099 = vmatprep.subr.mxu0 0.0
    %2100 = vmatpush1.msra.mxu0 0.0
    %2101 = vmatprep.subr.mxu0 0.0
    %2102 = vmatpush1.msra.mxu0 0.0
    %2103 = vmatprep.subr.mxu0 0.0
    %2104 = vmatpush1.msra.mxu0 0.0
    %2105 = vmatprep.subr.mxu0 0.0
    %2106 = vmatpush1.msra.mxu0 0.0
    %2107 = vmatprep.subr.mxu0 0.0
    %2108 = vmatpush1.msra.mxu0 0.0
    %2109 = vmatprep.subr.mxu0 0.0
    %2110 = vmatpush1.msra.mxu0 0.0
    %2111 = vmatprep.subr.mxu0 0.0
    %2112 = vmatpush1.msra.mxu0 0.0
    %2113 = vmatprep.subr.mxu0 0.0
    %2114 = vmatpush1.msra.mxu0 0.0
    %2115 = vmatprep.subr.mxu0 0.0
    %2116 = vmatpush1.msra.mxu0 0.0
    %2117 = vmatprep.subr.mxu0 0.0
    %2118 = vmatpush1.msra.mxu0 0.0
    %2119 = vmatprep.subr.mxu0 0.0
    %2120 = vmatpush1.msra.mxu0 0.0
    %2121 = vmatprep.subr.mxu0 0.0
    %2122 = vmatpush1.msra.mxu0 0.0
    %2123 = vmatprep.subr.mxu0 0.0
    %2124 = vmatpush1.msra.mxu0 0.0
    %2125 = vmatprep.subr.mxu0 0.0
    %2126 = vmatpush1.msra.mxu0 0.0
    %2127 = vmatprep.subr.mxu0 0.0
    %2128 = vmatpush1.msra.mxu0 0.0
    %2129 = vmatprep.subr.mxu0 0.0
    %2130 = vmatpush1.msra.mxu0 0.0
    %2131 = vmatprep.subr.mxu0 0.0
    %2132 = vmatpush1.msra.mxu0 0.0
    %2133 = vmatprep.subr.mxu0 0.0
    %2134 = vmatpush1.msra.mxu0 0.0
    %2135 = vmatprep.subr.mxu0 0.0
    %2136 = vmatpush1.msra.mxu0 0.0
    %2137 = vmatprep.subr.mxu0 0.0
    %2138 = vmatpush1.msra.mxu0 0.0
    %2139 = vmatprep.subr.mxu0 0.0
    %2140 = vmatpush1.msra.mxu0 0.0
    %2141 = vmatprep.subr.mxu0 0.0
    %2142 = vmatpush1.msra.mxu0 0.0
    %2143 = vmatprep.subr.mxu0 0.0
    %2144 = vmatpush1.msra.mxu0 0.0
    %2145 = vmatprep.subr.mxu0 0.0
    %2146 = vmatpush1.msra.mxu0 0.0
    %2147 = vmatprep.subr.mxu0 0.0
    %2148 = vmatpush1.msra.mxu0 0.0
    %2149 = vmatprep.subr.mxu0 0.0
    %2150 = vmatpush1.msra.mxu0 0.0
    %2151 = vmatprep.subr.mxu0 0.0
    %2152 = vmatpush1.msra.mxu0 0.0
    %2153 = vmatprep.subr.mxu0 0.0
    %2154 = vmatpush1.msra.mxu0 0.0
    %2155 = vmatprep.subr.mxu0 0.0
    %2156 = vmatpush1.msra.mxu0 0.0
    %2157 = vmatprep.subr.mxu0 0.0
    %2158 = vmatpush1.msra.mxu0 0.0
    %2159 = vmatprep.mubr.f32.mxu0 0.0
    %v2160 = vand.u32 %v1790, 4294901760
    %2161 = vmatmul.mubr.f32.gmra.mrb[0].mxu0 %v2160
    %v2162 = vpop.f32.mrb[0].mxu0
    %v2163 = vadd.f32 %v2089, %v2162
    %v2164 = vpop.f32.mrb[0].mxu0
    %2165 = vdwg.mxu0
    %2166 = vmatprep.subr.mxu0 0.0
    %v2167 = vand.u32 %v687, 4294901760
    %2168 = vmatpush1.msra.mxu0 %v2167
    %2169 = vmatprep.subr.mxu0 0.0
    %2170 = vmatpush1.msra.mxu0 0.0
    %2171 = vmatprep.subr.mxu0 0.0
    %2172 = vmatpush1.msra.mxu0 0.0
    %2173 = vmatprep.subr.mxu0 0.0
    %2174 = vmatpush1.msra.mxu0 0.0
    %2175 = vmatprep.subr.mxu0 0.0
    %2176 = vmatpush1.msra.mxu0 0.0
    %2177 = vmatprep.subr.mxu0 0.0
    %2178 = vmatpush1.msra.mxu0 0.0
    %2179 = vmatprep.subr.mxu0 0.0
    %2180 = vmatpush1.msra.mxu0 0.0
    %2181 = vmatprep.subr.mxu0 0.0
    %2182 = vmatpush1.msra.mxu0 0.0
    %2183 = vmatprep.subr.mxu0 0.0
    %2184 = vmatpush1.msra.mxu0 0.0
    %2185 = vmatprep.subr.mxu0 0.0
    %2186 = vmatpush1.msra.mxu0 0.0
    %2187 = vmatprep.subr.mxu0 0.0
    %2188 = vmatpush1.msra.mxu0 0.0
    %2189 = vmatprep.subr.mxu0 0.0
    %2190 = vmatpush1.msra.mxu0 0.0
    %2191 = vmatprep.subr.mxu0 0.0
    %2192 = vmatpush1.msra.mxu0 0.0
    %2193 = vmatprep.subr.mxu0 0.0
    %2194 = vmatpush1.msra.mxu0 0.0
    %2195 = vmatprep.subr.mxu0 0.0
    %2196 = vmatpush1.msra.mxu0 0.0
    %2197 = vmatprep.subr.mxu0 0.0
    %2198 = vmatpush1.msra.mxu0 0.0
    %2199 = vmatprep.subr.mxu0 0.0
    %2200 = vmatpush1.msra.mxu0 0.0
    %2201 = vmatprep.subr.mxu0 0.0
    %2202 = vmatpush1.msra.mxu0 0.0
    %2203 = vmatprep.subr.mxu0 0.0
    %2204 = vmatpush1.msra.mxu0 0.0
    %2205 = vmatprep.subr.mxu0 0.0
    %2206 = vmatpush1.msra.mxu0 0.0
    %2207 = vmatprep.subr.mxu0 0.0
    %2208 = vmatpush1.msra.mxu0 0.0
    %2209 = vmatprep.subr.mxu0 0.0
    %2210 = vmatpush1.msra.mxu0 0.0
    %2211 = vmatprep.subr.mxu0 0.0
    %2212 = vmatpush1.msra.mxu0 0.0
    %2213 = vmatprep.subr.mxu0 0.0
    %2214 = vmatpush1.msra.mxu0 0.0
    %2215 = vmatprep.subr.mxu0 0.0
    %2216 = vmatpush1.msra.mxu0 0.0
    %2217 = vmatprep.subr.mxu0 0.0
    %2218 = vmatpush1.msra.mxu0 0.0
    %2219 = vmatprep.subr.mxu0 0.0
    %2220 = vmatpush1.msra.mxu0 0.0
    %2221 = vmatprep.subr.mxu0 0.0
    %2222 = vmatpush1.msra.mxu0 0.0
    %2223 = vmatprep.subr.mxu0 0.0
    %2224 = vmatpush1.msra.mxu0 0.0
    %2225 = vmatprep.subr.mxu0 0.0
    %2226 = vmatpush1.msra.mxu0 0.0
    %2227 = vmatprep.subr.mxu0 0.0
    %2228 = vmatpush1.msra.mxu0 0.0
    %2229 = vmatprep.subr.mxu0 0.0
    %2230 = vmatpush1.msra.mxu0 0.0
    %2231 = vmatprep.mubr.f32.mxu0 0.0
    %v2232 = vand.u32 %v1790, 4294901760
    %2233 = vmatmul.mubr.f32.gmra.mrb[0].mxu0 %v2232
    %v2234 = vpop.f32.mrb[0].mxu0
    %v2235 = vadd.f32 %v2163, %v2234
    %v2236 = vpop.f32.mrb[0].mxu0
    %2237 = vdwg.mxu0
    %v2238 = vld [vmem:[%s1] sm:$0x1]
    %v2239 = vld [vmem:[%s2] sm:$0x1]
    %v2240 = vmul.f32 %v1135, %v2235
    %v2242 = vlaneseq
    %v2243 = vshrl.u32 %v2242, 7
    %v2244 = vsub.s32 0, %v2243
    %v2245 = vrot.slane %v2238, %v2244
    %v2247 = vmul.f32 %v2240, %v2245
    %v2249 = vlaneseq
    %v2250 = vshrl.u32 %v2249, 7
    %v2251 = vsub.s32 0, %v2250
    %v2252 = vrot.slane %v2239, %v2251
    %v2254 = vadd.f32 %v2247, %v2252
    %2255 = vst [vmem:[#allocation2] sm:$0xf] %v2254
    // Predicated region
    $region22: #{tpu_custom_call.1} parent=1 // pred_check
      _
    $region23: #{tpu_custom_call.1} parent=1 // pred_check_branch
      %2257 = sbr.rel (0) target = $region25
    $region24: #{tpu_custom_call.1} parent=1 // pred_region
      %s2259 = ssub.s32 64, 64
      %2260 = vsyncadd [#allocation3], %s2259
      %s2262 = sshll.u32 [#allocation2], 4
      %s2263 = int_to_ptr.vmem [resolvable:$true] %s2262
      %2265 = dma.vmem_to_hbm [thread:$0]  %s2263, 64, %s5, [#allocation3]
    $region25: #{tpu_custom_call.1} parent=1 // pred_fallthru
      _
    // Predicated region
    $region26: #{tpu_custom_call.1} parent=1 // pred_check
      _
    $region27: #{tpu_custom_call.1} parent=1 // pred_check_branch
      %2267 = sbr.rel (0) target = $region29
    $region28: #{tpu_custom_call.1} parent=1 // pred_region
      %2268 = dma.done [#allocation3], 64
    $region29: #{tpu_custom_call.1} parent=1 // pred_fallthru
      _
    %2269 = vsyncpa [#allocation3], 1

</llo_original>
